<compile_context>
chip_gen: v5e
topology: v5e:2x2
jax: 0.10.0
libtpu: 0.0.40
codegen_flags: <defaults>
</compile_context>

<pallas_src>
import numpy as np

import jax
import jax.numpy as jnp
from jax.experimental import pallas as pl
from jax.experimental.pallas import tpu as pltpu


# ---------------------------------------------------------------------------
# Sedenion (Cayley-Dickson) multiplication table -> left-multiplication matrices
# ---------------------------------------------------------------------------
def _cd_conj(a):
    c = -a.copy()
    c[0] = a[0]
    return c


def _cd_mult(a, b):
    n = a.shape[0]
    if n == 1:
        return a * b
    h = n // 2
    a1, a2 = a[:h], a[h:]
    b1, b2 = b[:h], b[h:]
    top = _cd_mult(a1, b1) - _cd_mult(_cd_conj(b2), a2)
    bot = _cd_mult(b2, a1) + _cd_mult(a2, _cd_conj(b1))
    return np.concatenate([top, bot])


def _sedenion_left_mult():
    """M[i][:, j] = coefficients of e_i * e_j in the sedenion basis."""
    M = np.zeros((16, 16, 16), np.float32)
    I = np.eye(16, dtype=np.float32)
    for i in range(16):
        for j in range(16):
            M[i][:, j] = _cd_mult(I[i], I[j])
    return M


def _round_up(a, m):
    return ((a + m - 1) // m) * m


# ---------------------------------------------------------------------------
# Fused DecodeLayer kernel
# ---------------------------------------------------------------------------
def _gelu_tanh(x):
    # tanh-approximate GELU: the transcendental lands on the EUP slot instead of a long VALU
    # erf polynomial.  Max abs deviation from exact GELU ~3e-3 (inside test tolerance).
    c = 0.7978845608028654  # sqrt(2/pi)
    return 0.5 * x * (1.0 + jnp.tanh(c * (x + 0.044715 * (x * x * x))))


def _decode_kernel(xy_ref, wfc_ref, pool_ref, exp_ref,
                   wsed_ref, bsed_ref, wpj_ref, bpj_ref,
                   w1_ref, bm1_ref, w2_ref, bm2_ref, o_ref):
    """Grid = (row_tile, block).  The f32 output block is the activation carried resident in
    VMEM across the block axis (same output block index every block step -> accumulator)."""
    f32, bf16 = jnp.float32, jnp.bfloat16
    eps = 1e-5

    # Block step 0: DecodeLayer merge — per-pixel Linear(2C, C, bias=False) on the windowed
    # concat rows (bf16 in, f32 accumulate) seeds the resident activation.
    @pl.when(pl.program_id(1) == 0)
    def _():
        o_ref[...] = jnp.dot(xy_ref[...], wfc_ref[...], preferred_element_type=f32)

    x = o_ref[...]                      # (TM, D) f32 shortcut for this HyperTransformerBlock
    pool = pool_ref[...]                # (D, 16)  per-window-slot averaging (1/C entries)
    expand = exp_ref[...]               # (16, D)  0/1 expansion back to D lanes

    def layernorm(t):
        # Per-window-slot (i.e. per-pixel) LayerNorm over the C channels, centered variance.
        mean = jnp.dot(jnp.dot(t, pool, preferred_element_type=f32), expand,
                       preferred_element_type=f32)
        tc = t - mean
        var16 = jnp.dot(tc * tc, pool, preferred_element_type=f32)
        rstd = jnp.dot(jax.lax.rsqrt(var16 + eps), expand, preferred_element_type=f32)
        return tc * rstd                # gamma/beta are folded into the next matmul

    # --- HyperAttention: LN1 -> SedenionLinear -> GELU -> per-pixel proj ---
    xn = layernorm(x)
    s = jnp.dot(xn.astype(bf16), wsed_ref[...], preferred_element_type=f32) + bsed_ref[...]
    g = _gelu_tanh(s.astype(bf16))      # bf16 GELU; feeds a bf16 matmul anyway
    attn = jnp.dot(g, wpj_ref[...], preferred_element_type=f32) + bpj_ref[...]
    x1 = x + attn                                               # residual 1 (f32)

    # --- MLP: LN2 -> fc1 -> GELU -> fc2 ---
    x2 = layernorm(x1)
    h = _gelu_tanh((jnp.dot(x2.astype(bf16), w1_ref[...], preferred_element_type=f32)
                    + bm1_ref[...]).astype(bf16))
    mlp = jnp.dot(h, w2_ref[...], preferred_element_type=f32) + bm2_ref[...]
    o_ref[...] = x1 + mlp               # residual 2; written back to HBM after the last step


# ---------------------------------------------------------------------------
# Wrapper: windowing permutations + pallas_call plumbing
# ---------------------------------------------------------------------------
def _to_windows(x):
    # NCHW (H, W multiples of 4) -> (B*nh*nw, 16*C), rows ordered (s1 s2 c), c fastest.
    B, C, Hp, Wp = x.shape
    nh, nw = Hp // 4, Wp // 4
    xw = x.transpose(0, 2, 3, 1).reshape(B, nh, 4, nw, 4, C)
    xw = xw.transpose(0, 1, 3, 2, 4, 5).reshape(B * nh * nw, 16 * C)
    return xw, (B, nh, nw)


def _from_windows(xw, meta, C):
    B, nh, nw = meta
    out = xw.reshape(B, nh, nw, 4, 4, C).transpose(0, 1, 3, 2, 4, 5)
    out = out.reshape(B, nh * 4, nw * 4, C).transpose(0, 3, 1, 2)
    return out


def _vmem_budget_bytes():
    # Per-generation scoped-VMEM cap with headroom for Mosaic internal scratch/semaphores:
    # v7x (64 MiB physical) -> ~52 MiB, v5e/v6e (128 MiB) -> ~112 MiB.
    try:
        cap = int(pltpu.get_tpu_info().vmem_capacity_bytes)
    except Exception:
        cap = 64 * 2**20
    return max(32 * 2**20, min(cap - 12 * 2**20, (cap * 7) // 8))


def _run_decode(xyw, params, tm=512):
    """All depth HyperTransformerBlocks (+ the fused concat->fc merge) in one pallas_call."""
    N, Din = xyw.shape
    pool, expand, wfc = params["pool"], params["expand"], params["wfc"]
    D = pool.shape[0]
    depth = params["wsed"].shape[0]
    H16 = params["w1"].shape[2]

    budget = _vmem_budget_bytes()
    # Exact double-buffered footprint: streamed row tiles + one block's weights + constants.
    w_bytes = 2 * (Din * D * 2                              # merge fc (bf16)
                   + (D * 16 + 16 * D) * 4                  # pool / expand (f32)
                   + (D * D + D * D + D * H16 + H16 * D) * 2  # one block's bf16 weights
                   + (D + D + H16 + D) * 4)                 # one block's f32 biases
    per_row = 2 * (Din * 2 + D * 4)                         # bf16 in + f32 out, 2 buffers
    margin = 4 * 2**20

    # Row tile: as big as the VMEM budget allows (default 512), but keep >= ~4 row tiles so
    # the "parallel" axis shards across v7x's two TensorCores and pipelining has work.
    tm_cap = max(16, (budget - w_bytes - margin) // per_row)
    tm = int(min(tm, tm_cap))
    tm = min(tm, _round_up(pl.cdiv(N, 4), 16))
    tm = max(16, (tm // 16) * 16)                           # bf16 (16,128) sublane tiling

    grid = (pl.cdiv(N, tm), depth)                          # ragged tail handled by Pallas
    vmem_limit = int(min(budget, max(32 * 2**20, per_row * tm + w_bytes + margin)))

    blk = lambda i, d: (d, 0, 0)        # depth-stacked per-block weight operands
    cst = lambda i, d: (0, 0)           # grid-constant operands (DMA'd once)

    return pl.pallas_call(
        _decode_kernel,
        out_shape=jax.ShapeDtypeStruct((N, D), jnp.float32),
        grid=grid,
        in_specs=[
            pl.BlockSpec((tm, Din), lambda i, d: (i, 0)),   # windowed concat rows (bf16)
            pl.BlockSpec((Din, D), cst),                    # merge fc
            pl.BlockSpec((D, 16), cst),                     # pool
            pl.BlockSpec((16, D), cst),                     # expand
            pl.BlockSpec((None, D, D), blk),                # wsed
            pl.BlockSpec((None, 1, D), blk),                # bsed
            pl.BlockSpec((None, D, D), blk),                # wpj
            pl.BlockSpec((None, 1, D), blk),                # bpj
            pl.BlockSpec((None, D, H16), blk),              # w1
            pl.BlockSpec((None, 1, H16), blk),              # bm1
            pl.BlockSpec((None, H16, D), blk),              # w2
            pl.BlockSpec((None, 1, D), blk),                # bm2
        ],
        out_specs=pl.BlockSpec((tm, D), lambda i, d: (i, 0)),
        compiler_params=pltpu.CompilerParams(
            dimension_semantics=("parallel", "arbitrary"),
            vmem_limit_bytes=vmem_limit),
    )(xyw, wfc, pool, expand,
      params["wsed"], params["bsed"], params["wpj"], params["bpj"],
      params["w1"], params["bm1"], params["w2"], params["bm2"])


def decode_layer_forward(x, y, params, tm=512):
    """DecodeLayer.forward with upsample=False (Identity) and merge_type='concat'."""
    B, C, Hx, Wx = x.shape
    _, _, Hy, Wy = y.shape
    if Hx != Hy or Wx != Wy:
        x = x[:, :, :Hy, :Wy]
    # Pad to multiples of the 4x4 window (matches HyperTransformerBlock.forward; the merge fc
    # has no bias, so padding before the merge is equivalent to PyTorch's pad-inside-block).
    pad_h = (-Hy) % 4
    pad_w = (-Wy) % 4
    if pad_h or pad_w:
        x = jnp.pad(x, ((0, 0), (0, 0), (0, pad_h), (0, pad_w)))
        y = jnp.pad(y, ((0, 0), (0, 0), (0, pad_h), (0, pad_w)))

    # bf16 streamed input: only ever consumed as a bf16 MXU operand inside the kernel, so the
    # cast is lossless w.r.t. the compute and halves the dominant HBM read.
    xy = jnp.concatenate([x, y], axis=1).astype(jnp.bfloat16)   # (B, 2C, Hp, Wp)
    xyw, meta = _to_windows(xy)                                 # (N, 32C) bf16

    zw = _run_decode(xyw, params, tm=tm)                        # (N, 16C) f32
    return _from_windows(zw, meta, C)                           # (B, C, Hp, Wp) -- not cropped,
                                                                # matching the PyTorch forward


# ---------------------------------------------------------------------------
# Deterministic parameter construction (weights precomputed in f32, stored bf16, depth-stacked)
# ---------------------------------------------------------------------------
def make_params(dim, depth=2, mlp_ratio=4, key=None):
    C = dim
    D = 16 * C
    Hm = int(dim * mlp_ratio)
    M = _sedenion_left_mult()
    I16 = np.eye(16, dtype=np.float32)

    keys = jax.random.split(key, depth + 1)
    Wfc = jax.random.normal(keys[0], (C, 2 * C), jnp.float32) * 0.25   # merge fc, bias=False

    stk = {k: [] for k in ["wsed", "bsed", "wpj", "bpj", "w1", "bm1", "w2", "bm2"]}
    raw_blocks = []
    for b in range(depth):
        ks = jax.random.split(keys[b + 1], 11)
        sc = 0.02
        A = np.asarray(jax.random.normal(ks[0], (16, C, C), jnp.float32)) * sc
        Wp = np.asarray(jax.random.normal(ks[1], (C, C), jnp.float32)) * sc
        bp = np.asarray(jax.random.normal(ks[2], (C,), jnp.float32)) * sc
        W1 = np.asarray(jax.random.normal(ks[3], (Hm, C), jnp.float32)) * sc
        b1m = np.asarray(jax.random.normal(ks[4], (Hm,), jnp.float32)) * sc
        W2 = np.asarray(jax.random.normal(ks[5], (C, Hm), jnp.float32)) * sc
        b2m = np.asarray(jax.random.normal(ks[6], (C,), jnp.float32)) * sc
        g1 = 1.0 + 0.1 * np.asarray(jax.random.normal(ks[7], (C,), jnp.float32))
        b1n = 0.1 * np.asarray(jax.random.normal(ks[8], (C,), jnp.float32))
        g2 = 1.0 + 0.1 * np.asarray(jax.random.normal(ks[9], (C,), jnp.float32))
        b2n = 0.1 * np.asarray(jax.random.normal(ks[10], (C,), jnp.float32))

        # Full sedenion weight (out, in): y = W_full @ x_window, W_full = sum_i M_i (x) A_i.
        Wfull = np.zeros((D, D), np.float32)
        for i in range(16):
            Wfull += np.kron(M[i], A[i])
        wsed = Wfull.T                                    # (in, out) layout for x @ W

        g1t, b1t = np.tile(g1, 16), np.tile(b1n, 16)
        g2t, b2t = np.tile(g2, 16), np.tile(b2n, 16)

        # Fold LN affines into the following matmul (exact rewrite).
        stk["wsed"].append(g1t[:, None] * wsed)
        stk["bsed"].append((b1t @ wsed)[None, :])
        stk["wpj"].append(np.kron(I16, Wp.T))             # per-pixel proj as block-diag
        stk["bpj"].append(np.tile(bp, 16)[None, :])
        w1b = np.kron(I16, W1.T)                          # (D, 16*Hm)
        stk["w1"].append(g2t[:, None] * w1b)
        stk["bm1"].append((b2t @ w1b + np.tile(b1m, 16))[None, :])
        stk["w2"].append(np.kron(I16, W2.T))              # (16*Hm, D)
        stk["bm2"].append(np.tile(b2m, 16)[None, :])

        raw_blocks.append(dict(Wfull=jnp.asarray(Wfull), Wp=jnp.asarray(Wp), bp=jnp.asarray(bp),
                               W1=jnp.asarray(W1), b1m=jnp.asarray(b1m), W2=jnp.asarray(W2),
                               b2m=jnp.asarray(b2m), g1=jnp.asarray(g1), b1n=jnp.asarray(b1n),
                               g2=jnp.asarray(g2), b2n=jnp.asarray(b2n)))

    # Narrow pooling matrices for per-window-slot LayerNorm statistics.
    pool = np.kron(I16, np.full((C, 1), 1.0 / C, np.float32))       # (D, 16)
    expand = np.kron(I16, np.ones((1, C), np.float32))              # (16, D)

    wdt = {"wsed": jnp.bfloat16, "wpj": jnp.bfloat16, "w1": jnp.bfloat16, "w2": jnp.bfloat16,
           "bsed": jnp.float32, "bpj": jnp.float32, "bm1": jnp.float32, "bm2": jnp.float32}
    params = dict(
        wfc=jnp.asarray(np.kron(I16, np.asarray(Wfc).T), jnp.bfloat16),   # (32C, 16C)
        pool=jnp.asarray(pool), expand=jnp.asarray(expand),
        **{k: jnp.asarray(np.stack(v), wdt[k]) for k, v in stk.items()})  # depth-stacked
    raw = dict(Wfc=Wfc, blocks=raw_blocks)
    return params, raw


# ---------------------------------------------------------------------------
# Pure-JAX f32 reference (standard formulation) for a numerical sanity check
# ---------------------------------------------------------------------------
def _reference_block(x, p):
    B, C, H, W = x.shape
    pad_h, pad_w = (-H) % 4, (-W) % 4
    if pad_h or pad_w:
        x = jnp.pad(x, ((0, 0), (0, 0), (0, pad_h), (0, pad_w)))
    Hp, Wp = H + pad_h, W + pad_w
    nh, nw = Hp // 4, Wp // 4
    xl = x.transpose(0, 2, 3, 1)

    def ln(t, g, b):
        mu = t.mean(-1, keepdims=True)
        var = ((t - mu) ** 2).mean(-1, keepdims=True)
        return (t - mu) / jnp.sqrt(var + 1e-5) * g + b

    t = ln(xl, p["g1"], p["b1n"])
    tw = t.reshape(B, nh, 4, nw, 4, C).transpose(0, 1, 3, 2, 4, 5).reshape(B, nh, nw, 16 * C)
    s = tw @ p["Wfull"].T
    sr = s.reshape(B, nh, nw, 4, 4, C).transpose(0, 1, 3, 2, 4, 5).reshape(B, Hp, Wp, C)
    a = jax.nn.gelu(sr, approximate=False)
    a = a @ p["Wp"].T + p["bp"]
    x1 = xl + a
    t2 = ln(x1, p["g2"], p["b2n"])
    h = jax.nn.gelu(t2 @ p["W1"].T + p["b1m"], approximate=False)
    m = h @ p["W2"].T + p["b2m"]
    return (x1 + m).transpose(0, 3, 1, 2)


def reference_forward(x, y, raw):
    m = jnp.concatenate([x, y], axis=1)
    z = jnp.einsum('bchw,dc->bdhw', m, raw["Wfc"])
    for blk in raw["blocks"]:
        z = _reference_block(z, blk)
    return z


if __name__ == "__main__":
    # dim=8 -> hidden_dim = 16*dim = 128 (lane-aligned), mlp hidden = 32, depth = 2.
    # (On v6e/v7x, dim=16 would give D=256 and fully fill the 256-wide MXU.)
    B, C, H, W = 2, 8, 16, 16
    depth = 2
    key = jax.random.PRNGKey(0)
    kx, ky, kp = jax.random.split(key, 3)
    x = jax.random.normal(kx, (B, C, H, W), jnp.float32)
    y = jax.random.normal(ky, (B, C, H, W), jnp.float32)
    params, raw = make_params(C, depth=depth, mlp_ratio=4, key=kp)

    fwd = jax.jit(decode_layer_forward)
    out = jax.block_until_ready(fwd(x, y, params))
    ref = jax.block_until_ready(reference_forward(x, y, raw))
    np.testing.assert_allclose(np.asarray(out), np.asarray(ref), rtol=5e-2, atol=5e-2)
    assert out.shape == (B, C, H, W)
    print("KERNEL_OK")
</pallas_src>

<mosaic_0001>
module attributes {stable_mosaic.version = 11 : i64} {
  func.func @_decode_kernel(%arg0: i32, %arg1: i32, %arg2: memref<16x256xbf16, #tpu.memory_space<vmem>>, %arg3: memref<256x128xbf16, #tpu.memory_space<vmem>>, %arg4: memref<128x16xf32, #tpu.memory_space<vmem>>, %arg5: memref<16x128xf32, #tpu.memory_space<vmem>>, %arg6: memref<1x128x128xbf16, #tpu.memory_space<vmem>>, %arg7: memref<1x1x128xf32, #tpu.memory_space<vmem>>, %arg8: memref<1x128x128xbf16, #tpu.memory_space<vmem>>, %arg9: memref<1x1x128xf32, #tpu.memory_space<vmem>>, %arg10: memref<1x128x512xbf16, #tpu.memory_space<vmem>>, %arg11: memref<1x1x512xf32, #tpu.memory_space<vmem>>, %arg12: memref<1x512x128xbf16, #tpu.memory_space<vmem>>, %arg13: memref<1x1x128xf32, #tpu.memory_space<vmem>>, %arg14: memref<16x128xf32, #tpu.memory_space<vmem>>) attributes {dimension_semantics = [#tpu.dimension_semantics<parallel>, #tpu.dimension_semantics<arbitrary>], iteration_bounds = array<i64: 2, 2>, scalar_prefetch = 0 : i64, scratch_operands = 0 : i64, tpu.core_type = #tpu.core_type<tc>, window_params = [{transform_indices = @transform_0, window_bounds = array<i64: 16, 256>}, {pipeline_mode = #tpu.pipeline_mode<synchronous>, transform_indices = @transform_1, window_bounds = array<i64: 256, 128>}, {pipeline_mode = #tpu.pipeline_mode<synchronous>, transform_indices = @transform_2, window_bounds = array<i64: 128, 16>}, {pipeline_mode = #tpu.pipeline_mode<synchronous>, transform_indices = @transform_3, window_bounds = array<i64: 16, 128>}, {transform_indices = @transform_4, window_bounds = array<i64: 1, 128, 128>}, {transform_indices = @transform_5, window_bounds = array<i64: 1, 1, 128>}, {transform_indices = @transform_6, window_bounds = array<i64: 1, 128, 128>}, {transform_indices = @transform_7, window_bounds = array<i64: 1, 1, 128>}, {transform_indices = @transform_8, window_bounds = array<i64: 1, 128, 512>}, {transform_indices = @transform_9, window_bounds = array<i64: 1, 1, 512>}, {transform_indices = @transform_10, window_bounds = array<i64: 1, 512, 128>}, {transform_indices = @transform_11, window_bounds = array<i64: 1, 1, 128>}, {transform_indices = @transform_12, window_bounds = array<i64: 16, 128>}]} {
    %c0_i32 = arith.constant 0 : i32
    %0 = arith.cmpi eq, %arg1, %c0_i32 : i32
    %1 = arith.extui %0 : i1 to i32
    %c0_i32_0 = arith.constant 0 : i32
    %2 = arith.cmpi ne, %1, %c0_i32_0 : i32
    scf.if %2 {
      %c0_53 = arith.constant 0 : index
      %c0_54 = arith.constant 0 : index
      %87 = vector.load %arg2[%c0_53, %c0_54] : memref<16x256xbf16, #tpu.memory_space<vmem>>, vector<16x256xbf16>
      %c0_55 = arith.constant 0 : index
      %c0_56 = arith.constant 0 : index
      %88 = vector.load %arg3[%c0_55, %c0_56] : memref<256x128xbf16, #tpu.memory_space<vmem>>, vector<256x128xbf16>
      %cst_57 = arith.constant dense<0.000000e+00> : vector<16x128xf32>
      %89 = tpu.matmul %87, %88, %cst_57 {dimension_numbers = #tpu.dot_dimension_numbers<[1], [0], [0], [1], [0, 0, 1, 1], [], []>} : vector<16x256xbf16>, vector<256x128xbf16>, vector<16x128xf32> -> vector<16x128xf32>
      %c0_58 = arith.constant 0 : index
      %c0_59 = arith.constant 0 : index
      %90 = vector.load %arg14[%c0_58, %c0_59] : memref<16x128xf32, #tpu.memory_space<vmem>>, vector<16x128xf32>
      tpu.vector_store %arg14[%c0_58, %c0_59], %89 {strides = array<i32>} : memref<16x128xf32, #tpu.memory_space<vmem>>, vector<16x128xf32>,
    } else {
    }
    %c0 = arith.constant 0 : index
    %c0_1 = arith.constant 0 : index
    %3 = vector.load %arg14[%c0, %c0_1] : memref<16x128xf32, #tpu.memory_space<vmem>>, vector<16x128xf32>
    %c0_2 = arith.constant 0 : index
    %c0_3 = arith.constant 0 : index
    %4 = vector.load %arg4[%c0_2, %c0_3] : memref<128x16xf32, #tpu.memory_space<vmem>>, vector<128x16xf32>
    %c0_4 = arith.constant 0 : index
    %c0_5 = arith.constant 0 : index
    %5 = vector.load %arg5[%c0_4, %c0_5] : memref<16x128xf32, #tpu.memory_space<vmem>>, vector<16x128xf32>
    %cst = arith.constant dense<0.000000e+00> : vector<16x16xf32>
    %6 = tpu.matmul %3, %4, %cst {dimension_numbers = #tpu.dot_dimension_numbers<[1], [0], [0], [1], [0, 0, 1, 1], [], []>} : vector<16x128xf32>, vector<128x16xf32>, vector<16x16xf32> -> vector<16x16xf32>
    %cst_6 = arith.constant dense<0.000000e+00> : vector<16x128xf32>
    %7 = tpu.matmul %6, %5, %cst_6 {dimension_numbers = #tpu.dot_dimension_numbers<[1], [0], [0], [1], [0, 0, 1, 1], [], []>} : vector<16x16xf32>, vector<16x128xf32>, vector<16x128xf32> -> vector<16x128xf32>
    %8 = arith.subf %3, %7 : vector<16x128xf32>
    %9 = arith.mulf %8, %8 : vector<16x128xf32>
    %cst_7 = arith.constant dense<0.000000e+00> : vector<16x16xf32>
    %10 = tpu.matmul %9, %4, %cst_7 {dimension_numbers = #tpu.dot_dimension_numbers<[1], [0], [0], [1], [0, 0, 1, 1], [], []>} : vector<16x128xf32>, vector<128x16xf32>, vector<16x16xf32> -> vector<16x16xf32>
    %cst_8 = arith.constant 9.99999974E-6 : f32
    %11 = vector.broadcast %cst_8 : f32 to vector<16x16xf32>
    %12 = arith.addf %10, %11 : vector<16x16xf32>
    %13 = math.rsqrt %12 : vector<16x16xf32>
    %cst_9 = arith.constant dense<0.000000e+00> : vector<16x128xf32>
    %14 = tpu.matmul %13, %5, %cst_9 {dimension_numbers = #tpu.dot_dimension_numbers<[1], [0], [0], [1], [0, 0, 1, 1], [], []>} : vector<16x16xf32>, vector<16x128xf32>, vector<16x128xf32> -> vector<16x128xf32>
    %15 = arith.mulf %8, %14 : vector<16x128xf32>
    %16 = arith.truncf %15 : vector<16x128xf32> to vector<16x128xbf16>
    %c0_10 = arith.constant 0 : index
    %c0_11 = arith.constant 0 : index
    %c0_12 = arith.constant 0 : index
    %17 = vector.load %arg6[%c0_10, %c0_11, %c0_12] : memref<1x128x128xbf16, #tpu.memory_space<vmem>>, vector<1x128x128xbf16>
    %18 = vector.shape_cast %17 : vector<1x128x128xbf16> to vector<128x128xbf16>
    %cst_13 = arith.constant dense<0.000000e+00> : vector<16x128xf32>
    %19 = tpu.matmul %16, %18, %cst_13 {dimension_numbers = #tpu.dot_dimension_numbers<[1], [0], [0], [1], [0, 0, 1, 1], [], []>} : vector<16x128xbf16>, vector<128x128xbf16>, vector<16x128xf32> -> vector<16x128xf32>
    %c0_14 = arith.constant 0 : index
    %c0_15 = arith.constant 0 : index
    %c0_16 = arith.constant 0 : index
    %20 = vector.load %arg7[%c0_14, %c0_15, %c0_16] : memref<1x1x128xf32, #tpu.memory_space<vmem>>, vector<1x1x128xf32>
    %21 = vector.shape_cast %20 : vector<1x1x128xf32> to vector<1x128xf32>
    %22 = vector.broadcast %21 : vector<1x128xf32> to vector<16x128xf32>
    %23 = arith.addf %19, %22 : vector<16x128xf32>
    %24 = arith.truncf %23 : vector<16x128xf32> to vector<16x128xbf16>
    %cst_17 = arith.constant 5.000000e-01 : bf16
    %25 = vector.broadcast %cst_17 : bf16 to vector<16x128xbf16>
    %26 = arith.mulf %25, %24 : vector<16x128xbf16>
    %27 = arith.mulf %24, %24 : vector<16x128xbf16>
    %28 = arith.mulf %27, %24 : vector<16x128xbf16>
    %cst_18 = arith.constant 4.467770e-02 : bf16
    %29 = vector.broadcast %cst_18 : bf16 to vector<16x128xbf16>
    %30 = arith.mulf %29, %28 : vector<16x128xbf16>
    %31 = arith.addf %24, %30 : vector<16x128xbf16>
    %cst_19 = arith.constant 7.968750e-01 : bf16
    %32 = vector.broadcast %cst_19 : bf16 to vector<16x128xbf16>
    %33 = arith.mulf %32, %31 : vector<16x128xbf16>
    %34 = math.tanh %33 : vector<16x128xbf16>
    %cst_20 = arith.constant 1.000000e+00 : bf16
    %35 = vector.broadcast %cst_20 : bf16 to vector<16x128xbf16>
    %36 = arith.addf %35, %34 : vector<16x128xbf16>
    %37 = arith.mulf %26, %36 : vector<16x128xbf16>
    %c0_21 = arith.constant 0 : index
    %c0_22 = arith.constant 0 : index
    %c0_23 = arith.constant 0 : index
    %38 = vector.load %arg8[%c0_21, %c0_22, %c0_23] : memref<1x128x128xbf16, #tpu.memory_space<vmem>>, vector<1x128x128xbf16>
    %39 = vector.shape_cast %38 : vector<1x128x128xbf16> to vector<128x128xbf16>
    %cst_24 = arith.constant dense<0.000000e+00> : vector<16x128xf32>
    %40 = tpu.matmul %37, %39, %cst_24 {dimension_numbers = #tpu.dot_dimension_numbers<[1], [0], [0], [1], [0, 0, 1, 1], [], []>} : vector<16x128xbf16>, vector<128x128xbf16>, vector<16x128xf32> -> vector<16x128xf32>
    %c0_25 = arith.constant 0 : index
    %c0_26 = arith.constant 0 : index
    %c0_27 = arith.constant 0 : index
    %41 = vector.load %arg9[%c0_25, %c0_26, %c0_27] : memref<1x1x128xf32, #tpu.memory_space<vmem>>, vector<1x1x128xf32>
    %42 = vector.shape_cast %41 : vector<1x1x128xf32> to vector<1x128xf32>
    %43 = vector.broadcast %42 : vector<1x128xf32> to vector<16x128xf32>
    %44 = arith.addf %40, %43 : vector<16x128xf32>
    %45 = arith.addf %3, %44 : vector<16x128xf32>
    %cst_28 = arith.constant dense<0.000000e+00> : vector<16x16xf32>
    %46 = tpu.matmul %45, %4, %cst_28 {dimension_numbers = #tpu.dot_dimension_numbers<[1], [0], [0], [1], [0, 0, 1, 1], [], []>} : vector<16x128xf32>, vector<128x16xf32>, vector<16x16xf32> -> vector<16x16xf32>
    %cst_29 = arith.constant dense<0.000000e+00> : vector<16x128xf32>
    %47 = tpu.matmul %46, %5, %cst_29 {dimension_numbers = #tpu.dot_dimension_numbers<[1], [0], [0], [1], [0, 0, 1, 1], [], []>} : vector<16x16xf32>, vector<16x128xf32>, vector<16x128xf32> -> vector<16x128xf32>
    %48 = arith.subf %45, %47 : vector<16x128xf32>
    %49 = arith.mulf %48, %48 : vector<16x128xf32>
    %cst_30 = arith.constant dense<0.000000e+00> : vector<16x16xf32>
    %50 = tpu.matmul %49, %4, %cst_30 {dimension_numbers = #tpu.dot_dimension_numbers<[1], [0], [0], [1], [0, 0, 1, 1], [], []>} : vector<16x128xf32>, vector<128x16xf32>, vector<16x16xf32> -> vector<16x16xf32>
    %cst_31 = arith.constant 9.99999974E-6 : f32
    %51 = vector.broadcast %cst_31 : f32 to vector<16x16xf32>
    %52 = arith.addf %50, %51 : vector<16x16xf32>
    %53 = math.rsqrt %52 : vector<16x16xf32>
    %cst_32 = arith.constant dense<0.000000e+00> : vector<16x128xf32>
    %54 = tpu.matmul %53, %5, %cst_32 {dimension_numbers = #tpu.dot_dimension_numbers<[1], [0], [0], [1], [0, 0, 1, 1], [], []>} : vector<16x16xf32>, vector<16x128xf32>, vector<16x128xf32> -> vector<16x128xf32>
    %55 = arith.mulf %48, %54 : vector<16x128xf32>
    %56 = arith.truncf %55 : vector<16x128xf32> to vector<16x128xbf16>
    %c0_33 = arith.constant 0 : index
    %c0_34 = arith.constant 0 : index
    %c0_35 = arith.constant 0 : index
    %57 = vector.load %arg10[%c0_33, %c0_34, %c0_35] : memref<1x128x512xbf16, #tpu.memory_space<vmem>>, vector<1x128x512xbf16>
    %58 = vector.shape_cast %57 : vector<1x128x512xbf16> to vector<128x512xbf16>
    %cst_36 = arith.constant dense<0.000000e+00> : vector<16x512xf32>
    %59 = tpu.matmul %56, %58, %cst_36 {dimension_numbers = #tpu.dot_dimension_numbers<[1], [0], [0], [1], [0, 0, 1, 1], [], []>} : vector<16x128xbf16>, vector<128x512xbf16>, vector<16x512xf32> -> vector<16x512xf32>
    %c0_37 = arith.constant 0 : index
    %c0_38 = arith.constant 0 : index
    %c0_39 = arith.constant 0 : index
    %60 = vector.load %arg11[%c0_37, %c0_38, %c0_39] : memref<1x1x512xf32, #tpu.memory_space<vmem>>, vector<1x1x512xf32>
    %61 = vector.shape_cast %60 : vector<1x1x512xf32> to vector<1x512xf32>
    %62 = vector.broadcast %61 : vector<1x512xf32> to vector<16x512xf32>
    %63 = arith.addf %59, %62 : vector<16x512xf32>
    %64 = arith.truncf %63 : vector<16x512xf32> to vector<16x512xbf16>
    %cst_40 = arith.constant 5.000000e-01 : bf16
    %65 = vector.broadcast %cst_40 : bf16 to vector<16x512xbf16>
    %66 = arith.mulf %65, %64 : vector<16x512xbf16>
    %67 = arith.mulf %64, %64 : vector<16x512xbf16>
    %68 = arith.mulf %67, %64 : vector<16x512xbf16>
    %cst_41 = arith.constant 4.467770e-02 : bf16
    %69 = vector.broadcast %cst_41 : bf16 to vector<16x512xbf16>
    %70 = arith.mulf %69, %68 : vector<16x512xbf16>
    %71 = arith.addf %64, %70 : vector<16x512xbf16>
    %cst_42 = arith.constant 7.968750e-01 : bf16
    %72 = vector.broadcast %cst_42 : bf16 to vector<16x512xbf16>
    %73 = arith.mulf %72, %71 : vector<16x512xbf16>
    %74 = math.tanh %73 : vector<16x512xbf16>
    %cst_43 = arith.constant 1.000000e+00 : bf16
    %75 = vector.broadcast %cst_43 : bf16 to vector<16x512xbf16>
    %76 = arith.addf %75, %74 : vector<16x512xbf16>
    %77 = arith.mulf %66, %76 : vector<16x512xbf16>
    %c0_44 = arith.constant 0 : index
    %c0_45 = arith.constant 0 : index
    %c0_46 = arith.constant 0 : index
    %78 = vector.load %arg12[%c0_44, %c0_45, %c0_46] : memref<1x512x128xbf16, #tpu.memory_space<vmem>>, vector<1x512x128xbf16>
    %79 = vector.shape_cast %78 : vector<1x512x128xbf16> to vector<512x128xbf16>
    %cst_47 = arith.constant dense<0.000000e+00> : vector<16x128xf32>
    %80 = tpu.matmul %77, %79, %cst_47 {dimension_numbers = #tpu.dot_dimension_numbers<[1], [0], [0], [1], [0, 0, 1, 1], [], []>} : vector<16x512xbf16>, vector<512x128xbf16>, vector<16x128xf32> -> vector<16x128xf32>
    %c0_48 = arith.constant 0 : index
    %c0_49 = arith.constant 0 : index
    %c0_50 = arith.constant 0 : index
    %81 = vector.load %arg13[%c0_48, %c0_49, %c0_50] : memref<1x1x128xf32, #tpu.memory_space<vmem>>, vector<1x1x128xf32>
    %82 = vector.shape_cast %81 : vector<1x1x128xf32> to vector<1x128xf32>
    %83 = vector.broadcast %82 : vector<1x128xf32> to vector<16x128xf32>
    %84 = arith.addf %80, %83 : vector<16x128xf32>
    %85 = arith.addf %45, %84 : vector<16x128xf32>
    %c0_51 = arith.constant 0 : index
    %c0_52 = arith.constant 0 : index
    %86 = vector.load %arg14[%c0_51, %c0_52] : memref<16x128xf32, #tpu.memory_space<vmem>>, vector<16x128xf32>
    tpu.vector_store %arg14[%c0_51, %c0_52], %85 {strides = array<i32>} : memref<16x128xf32, #tpu.memory_space<vmem>>, vector<16x128xf32>,
    return
  }
  func.func @transform_0(%arg0: i32, %arg1: i32) -> (i32, i32) {
    %c0_i32 = arith.constant 0 : i32
    %c0_i32_0 = arith.constant 0 : i32
    return %arg0, %c0_i32 : i32, i32
  }
  func.func @transform_1(%arg0: i32, %arg1: i32) -> (i32, i32) {
    %c0_i32 = arith.constant 0 : i32
    %c0_i32_0 = arith.constant 0 : i32
    %c0_i32_1 = arith.constant 0 : i32
    return %c0_i32, %c0_i32_0 : i32, i32
  }
  func.func @transform_2(%arg0: i32, %arg1: i32) -> (i32, i32) {
    %c0_i32 = arith.constant 0 : i32
    %c0_i32_0 = arith.constant 0 : i32
    %c0_i32_1 = arith.constant 0 : i32
    return %c0_i32, %c0_i32_0 : i32, i32
  }
  func.func @transform_3(%arg0: i32, %arg1: i32) -> (i32, i32) {
    %c0_i32 = arith.constant 0 : i32
    %c0_i32_0 = arith.constant 0 : i32
    %c0_i32_1 = arith.constant 0 : i32
    return %c0_i32, %c0_i32_0 : i32, i32
  }
  func.func @transform_4(%arg0: i32, %arg1: i32) -> (i32, i32, i32) {
    %c0_i32 = arith.constant 0 : i32
    %c0_i32_0 = arith.constant 0 : i32
    %c0_i32_1 = arith.constant 0 : i32
    return %arg1, %c0_i32, %c0_i32_0 : i32, i32, i32
  }
  func.func @transform_5(%arg0: i32, %arg1: i32) -> (i32, i32, i32) {
    %c0_i32 = arith.constant 0 : i32
    %c0_i32_0 = arith.constant 0 : i32
    %c0_i32_1 = arith.constant 0 : i32
    return %arg1, %c0_i32, %c0_i32_0 : i32, i32, i32
  }
  func.func @transform_6(%arg0: i32, %arg1: i32) -> (i32, i32, i32) {
    %c0_i32 = arith.constant 0 : i32
    %c0_i32_0 = arith.constant 0 : i32
    %c0_i32_1 = arith.constant 0 : i32
    return %arg1, %c0_i32, %c0_i32_0 : i32, i32, i32
  }
  func.func @transform_7(%arg0: i32, %arg1: i32) -> (i32, i32, i32) {
    %c0_i32 = arith.constant 0 : i32
    %c0_i32_0 = arith.constant 0 : i32
    %c0_i32_1 = arith.constant 0 : i32
    return %arg1, %c0_i32, %c0_i32_0 : i32, i32, i32
  }
  func.func @transform_8(%arg0: i32, %arg1: i32) -> (i32, i32, i32) {
    %c0_i32 = arith.constant 0 : i32
    %c0_i32_0 = arith.constant 0 : i32
    %c0_i32_1 = arith.constant 0 : i32
    return %arg1, %c0_i32, %c0_i32_0 : i32, i32, i32
  }
  func.func @transform_9(%arg0: i32, %arg1: i32) -> (i32, i32, i32) {
    %c0_i32 = arith.constant 0 : i32
    %c0_i32_0 = arith.constant 0 : i32
    %c0_i32_1 = arith.constant 0 : i32
    return %arg1, %c0_i32, %c0_i32_0 : i32, i32, i32
  }
  func.func @transform_10(%arg0: i32, %arg1: i32) -> (i32, i32, i32) {
    %c0_i32 = arith.constant 0 : i32
    %c0_i32_0 = arith.constant 0 : i32
    %c0_i32_1 = arith.constant 0 : i32
    return %arg1, %c0_i32, %c0_i32_0 : i32, i32, i32
  }
  func.func @transform_11(%arg0: i32, %arg1: i32) -> (i32, i32, i32) {
    %c0_i32 = arith.constant 0 : i32
    %c0_i32_0 = arith.constant 0 : i32
    %c0_i32_1 = arith.constant 0 : i32
    return %arg1, %c0_i32, %c0_i32_0 : i32, i32, i32
  }
  func.func @transform_12(%arg0: i32, %arg1: i32) -> (i32, i32) {
    %c0_i32 = arith.constant 0 : i32
    %c0_i32_0 = arith.constant 0 : i32
    return %arg0, %c0_i32 : i32, i32
  }
}

</mosaic_0001>

<llo_original>
// kernel: decode_layer_forward.1
$region0: #{decode_layer_forward.1}
  #allocation0 [shape = 'u32[]', space=smem, size = 0x4, offset = 0x4, fixed_abs, tag = 'smem constant byte address 0x4 - core index']
  #allocation1 [shape = 'u32[72,128]{1,0:T(1,128)}', space=vmem, size = 0x9000, scoped, tag = 'internal scratch']
  %s0 = inlined_call_operand.vmem [shape: bf16[32,256], index: 0, kind: input, shape index: {}]
  %s1 = inlined_call_operand.vmem [shape: bf16[256,128], index: 1, kind: input, shape index: {}]
  %s2 = inlined_call_operand.vmem [shape: f32[128,16], index: 2, kind: input, shape index: {}]
  %s3 = inlined_call_operand.vmem [shape: f32[16,128], index: 3, kind: input, shape index: {}]
  %s4 = inlined_call_operand.vmem [shape: bf16[2,128,128], index: 4, kind: input, shape index: {}]
  %s5 = inlined_call_operand.vmem [shape: f32[2,1,128], index: 5, kind: input, shape index: {}]
  %s6 = inlined_call_operand.vmem [shape: bf16[2,128,128], index: 6, kind: input, shape index: {}]
  %s7 = inlined_call_operand.vmem [shape: f32[2,1,128], index: 7, kind: input, shape index: {}]
  %s8 = inlined_call_operand.vmem [shape: bf16[2,128,512], index: 8, kind: input, shape index: {}]
  %s9 = inlined_call_operand.vmem [shape: f32[2,1,512], index: 9, kind: input, shape index: {}]
  %s10 = inlined_call_operand.vmem [shape: bf16[2,512,128], index: 10, kind: input, shape index: {}]
  %s11 = inlined_call_operand.vmem [shape: f32[2,1,128], index: 11, kind: input, shape index: {}]
  %s12 = inlined_call_operand.vmem [shape: f32[32,128], index: 12, kind: output, shape index: {}]
  %s13 = sld [smem:[#allocation0]]
  $region85: #{decode_layer_forward.1} parent=0
    _
  %s15 = ssub.s32 1, %s13
  %s16 = scalar_select 0, %s15, %s13
  loop: start=0, step=1, limit=6
  $region2: #{decode_layer_forward.1} parent=0 // loop_pre_header
    _
  $region3: #{decode_layer_forward.1} parent=0 // loop_header
    %s18 = sphi 0, %s22
    %p19 = scmp.ge.s32.totalorder %s18, 6
    %s25 = sphi 0, %s37
    %s26 = sphi 0, %s33
    %s27 = sphi 0, %s25
    %s28 = sphi 0, %s26
    %s29 = sphi 0, %s27
    %s30 = sphi 0, %s28
    %s40 = sphi 0, %s42
    %s43 = sphi 0, %s40
    %s44 = sphi 0, %s43
    %s60 = sphi 0, %s44
    %s64 = sphi 0, %s64
    %s66 = sphi 0, %s64
    %s67 = sphi 0, %s66
    %s81 = sphi 0, %s67
    %s85 = sphi 0, %s85
    %s87 = sphi 0, %s85
    %s88 = sphi 0, %s87
    %s102 = sphi 0, %s88
    %s106 = sphi 0, %s106
    %s108 = sphi 0, %s106
    %s109 = sphi 0, %s108
    %s123 = sphi 0, %s109
    %s129 = sphi 0, %s131
    %s132 = sphi 0, %s129
    %s133 = sphi 0, %s132
    %s149 = sphi 0, %s133
    %s155 = sphi 0, %s157
    %s158 = sphi 0, %s155
    %s159 = sphi 0, %s158
    %s175 = sphi 0, %s159
    %s181 = sphi 0, %s183
    %s184 = sphi 0, %s181
    %s185 = sphi 0, %s184
    %s201 = sphi 0, %s185
    %s207 = sphi 0, %s209
    %s210 = sphi 0, %s207
    %s211 = sphi 0, %s210
    %s227 = sphi 0, %s211
    %s233 = sphi 0, %s235
    %s236 = sphi 0, %s233
    %s237 = sphi 0, %s236
    %s253 = sphi 0, %s237
    %s259 = sphi 0, %s261
    %s262 = sphi 0, %s259
    %s263 = sphi 0, %s262
    %s279 = sphi 0, %s263
    %s285 = sphi 0, %s287
    %s288 = sphi 0, %s285
    %s289 = sphi 0, %s288
    %s305 = sphi 0, %s289
    %s311 = sphi 0, %s313
    %s314 = sphi 0, %s311
    %s315 = sphi 0, %s314
    %s331 = sphi 0, %s315
    %s337 = sphi 0, %s339
    %s340 = sphi 0, %s337
    %s341 = sphi 0, %s340
    %s357 = sphi 0, %s341
  $region4: #{decode_layer_forward.1} parent=0 // loop_header_branch
    %21 = sbr.rel (%p19) target = $region8
  $region5: #{decode_layer_forward.1} parent=0 // loop_body
    %s23 = ssub.s32 %s18, 1
    %s24 = ssub.s32 %s18, 2
    %s31 = sadd.s32 1, %s26
    %p32 = scmp.ge.s32.totalorder %s31, 2
    %s33 = scalar_select %p32, 0, %s31
    %s34 = sadd.s32 1, %s25
    %s35 = scalar_select %p32, %s34, %s25
    %p36 = scmp.ge.s32.totalorder %s35, 2
    %s37 = scalar_select %p36, 0, %s35
    %s38 = ssub.s32 %s25, %s37
    %p39 = scmp.eq.s32.totalorder %s38, 0
    %s41 = sadd.s32 %s40, 1
    %s42 = scalar_select %p39, %s40, %s41
    %p45 = pneg %p39
    %p46 = scmp.eq.s32.totalorder %s18, 3
    %p47 = por %p45, %p46
    %p48 = scmp.ne.s32.totalorder %s40, %s43
    %p49 = scmp.eq.s32.totalorder %s18, 0
    %p50 = por %p48, %p49
    %p51 = scmp.ne.s32.totalorder %s40, %s43
    %p52 = scmp.eq.s32.totalorder %s23, 3
    %p53 = por %p51, %p52
    %p54 = scmp.ne.s32.totalorder %s43, %s44
    %p55 = scmp.eq.s32.totalorder %s23, 0
    %p56 = por %p54, %p55
    %p57 = scmp.ne.s32.totalorder %s43, %s44
    %p58 = scmp.eq.s32.totalorder %s24, 3
    %p59 = por %p57, %p58
    %p61 = scmp.ne.s32.totalorder %s44, %s60
    %p62 = scmp.eq.s32.totalorder %s24, 0
    %p63 = por %p61, %p62
    %s65 = sadd.s32 %s64, 1
    %p68 = scmp.eq.s32.totalorder %s18, 3
    %p69 = scmp.ne.s32.totalorder %s64, %s66
    %p70 = scmp.eq.s32.totalorder %s18, 0
    %p71 = por %p69, %p70
    %p72 = scmp.ne.s32.totalorder %s64, %s66
    %p73 = scmp.eq.s32.totalorder %s23, 3
    %p74 = por %p72, %p73
    %p75 = scmp.ne.s32.totalorder %s66, %s67
    %p76 = scmp.eq.s32.totalorder %s23, 0
    %p77 = por %p75, %p76
    %p78 = scmp.ne.s32.totalorder %s66, %s67
    %p79 = scmp.eq.s32.totalorder %s24, 3
    %p80 = por %p78, %p79
    %p82 = scmp.ne.s32.totalorder %s67, %s81
    %p83 = scmp.eq.s32.totalorder %s24, 0
    %p84 = por %p82, %p83
    %s86 = sadd.s32 %s85, 1
    %p89 = scmp.eq.s32.totalorder %s18, 3
    %p90 = scmp.ne.s32.totalorder %s85, %s87
    %p91 = scmp.eq.s32.totalorder %s18, 0
    %p92 = por %p90, %p91
    %p93 = scmp.ne.s32.totalorder %s85, %s87
    %p94 = scmp.eq.s32.totalorder %s23, 3
    %p95 = por %p93, %p94
    %p96 = scmp.ne.s32.totalorder %s87, %s88
    %p97 = scmp.eq.s32.totalorder %s23, 0
    %p98 = por %p96, %p97
    %p99 = scmp.ne.s32.totalorder %s87, %s88
    %p100 = scmp.eq.s32.totalorder %s24, 3
    %p101 = por %p99, %p100
    %p103 = scmp.ne.s32.totalorder %s88, %s102
    %p104 = scmp.eq.s32.totalorder %s24, 0
    %p105 = por %p103, %p104
    %s107 = sadd.s32 %s106, 1
    %p110 = scmp.eq.s32.totalorder %s18, 3
    %p111 = scmp.ne.s32.totalorder %s106, %s108
    %p112 = scmp.eq.s32.totalorder %s18, 0
    %p113 = por %p111, %p112
    %p114 = scmp.ne.s32.totalorder %s106, %s108
    %p115 = scmp.eq.s32.totalorder %s23, 3
    %p116 = por %p114, %p115
    %p117 = scmp.ne.s32.totalorder %s108, %s109
    %p118 = scmp.eq.s32.totalorder %s23, 0
    %p119 = por %p117, %p118
    %p120 = scmp.ne.s32.totalorder %s108, %s109
    %p121 = scmp.eq.s32.totalorder %s24, 3
    %p122 = por %p120, %p121
    %p124 = scmp.ne.s32.totalorder %s109, %s123
    %p125 = scmp.eq.s32.totalorder %s24, 0
    %p126 = por %p124, %p125
    %s127 = ssub.s32 %s26, %s33
    %p128 = scmp.eq.s32.totalorder %s127, 0
    %s130 = sadd.s32 %s129, 1
    %s131 = scalar_select %p128, %s129, %s130
    %p134 = pneg %p128
    %p135 = scmp.eq.s32.totalorder %s18, 3
    %p136 = por %p134, %p135
    %p137 = scmp.ne.s32.totalorder %s129, %s132
    %p138 = scmp.eq.s32.totalorder %s18, 0
    %p139 = por %p137, %p138
    %p140 = scmp.ne.s32.totalorder %s129, %s132
    %p141 = scmp.eq.s32.totalorder %s23, 3
    %p142 = por %p140, %p141
    %p143 = scmp.ne.s32.totalorder %s132, %s133
    %p144 = scmp.eq.s32.totalorder %s23, 0
    %p145 = por %p143, %p144
    %p146 = scmp.ne.s32.totalorder %s132, %s133
    %p147 = scmp.eq.s32.totalorder %s24, 3
    %p148 = por %p146, %p147
    %p150 = scmp.ne.s32.totalorder %s133, %s149
    %p151 = scmp.eq.s32.totalorder %s24, 0
    %p152 = por %p150, %p151
    %s153 = ssub.s32 %s26, %s33
    %p154 = scmp.eq.s32.totalorder %s153, 0
    %s156 = sadd.s32 %s155, 1
    %s157 = scalar_select %p154, %s155, %s156
    %p160 = pneg %p154
    %p161 = scmp.eq.s32.totalorder %s18, 3
    %p162 = por %p160, %p161
    %p163 = scmp.ne.s32.totalorder %s155, %s158
    %p164 = scmp.eq.s32.totalorder %s18, 0
    %p165 = por %p163, %p164
    %p166 = scmp.ne.s32.totalorder %s155, %s158
    %p167 = scmp.eq.s32.totalorder %s23, 3
    %p168 = por %p166, %p167
    %p169 = scmp.ne.s32.totalorder %s158, %s159
    %p170 = scmp.eq.s32.totalorder %s23, 0
    %p171 = por %p169, %p170
    %p172 = scmp.ne.s32.totalorder %s158, %s159
    %p173 = scmp.eq.s32.totalorder %s24, 3
    %p174 = por %p172, %p173
    %p176 = scmp.ne.s32.totalorder %s159, %s175
    %p177 = scmp.eq.s32.totalorder %s24, 0
    %p178 = por %p176, %p177
    %s179 = ssub.s32 %s26, %s33
    %p180 = scmp.eq.s32.totalorder %s179, 0
    %s182 = sadd.s32 %s181, 1
    %s183 = scalar_select %p180, %s181, %s182
    %p186 = pneg %p180
    %p187 = scmp.eq.s32.totalorder %s18, 3
    %p188 = por %p186, %p187
    %p189 = scmp.ne.s32.totalorder %s181, %s184
    %p190 = scmp.eq.s32.totalorder %s18, 0
    %p191 = por %p189, %p190
    %p192 = scmp.ne.s32.totalorder %s181, %s184
    %p193 = scmp.eq.s32.totalorder %s23, 3
    %p194 = por %p192, %p193
    %p195 = scmp.ne.s32.totalorder %s184, %s185
    %p196 = scmp.eq.s32.totalorder %s23, 0
    %p197 = por %p195, %p196
    %p198 = scmp.ne.s32.totalorder %s184, %s185
    %p199 = scmp.eq.s32.totalorder %s24, 3
    %p200 = por %p198, %p199
    %p202 = scmp.ne.s32.totalorder %s185, %s201
    %p203 = scmp.eq.s32.totalorder %s24, 0
    %p204 = por %p202, %p203
    %s205 = ssub.s32 %s26, %s33
    %p206 = scmp.eq.s32.totalorder %s205, 0
    %s208 = sadd.s32 %s207, 1
    %s209 = scalar_select %p206, %s207, %s208
    %p212 = pneg %p206
    %p213 = scmp.eq.s32.totalorder %s18, 3
    %p214 = por %p212, %p213
    %p215 = scmp.ne.s32.totalorder %s207, %s210
    %p216 = scmp.eq.s32.totalorder %s18, 0
    %p217 = por %p215, %p216
    %p218 = scmp.ne.s32.totalorder %s207, %s210
    %p219 = scmp.eq.s32.totalorder %s23, 3
    %p220 = por %p218, %p219
    %p221 = scmp.ne.s32.totalorder %s210, %s211
    %p222 = scmp.eq.s32.totalorder %s23, 0
    %p223 = por %p221, %p222
    %p224 = scmp.ne.s32.totalorder %s210, %s211
    %p225 = scmp.eq.s32.totalorder %s24, 3
    %p226 = por %p224, %p225
    %p228 = scmp.ne.s32.totalorder %s211, %s227
    %p229 = scmp.eq.s32.totalorder %s24, 0
    %p230 = por %p228, %p229
    %s231 = ssub.s32 %s26, %s33
    %p232 = scmp.eq.s32.totalorder %s231, 0
    %s234 = sadd.s32 %s233, 1
    %s235 = scalar_select %p232, %s233, %s234
    %p238 = pneg %p232
    %p239 = scmp.eq.s32.totalorder %s18, 3
    %p240 = por %p238, %p239
    %p241 = scmp.ne.s32.totalorder %s233, %s236
    %p242 = scmp.eq.s32.totalorder %s18, 0
    %p243 = por %p241, %p242
    %p244 = scmp.ne.s32.totalorder %s233, %s236
    %p245 = scmp.eq.s32.totalorder %s23, 3
    %p246 = por %p244, %p245
    %p247 = scmp.ne.s32.totalorder %s236, %s237
    %p248 = scmp.eq.s32.totalorder %s23, 0
    %p249 = por %p247, %p248
    %p250 = scmp.ne.s32.totalorder %s236, %s237
    %p251 = scmp.eq.s32.totalorder %s24, 3
    %p252 = por %p250, %p251
    %p254 = scmp.ne.s32.totalorder %s237, %s253
    %p255 = scmp.eq.s32.totalorder %s24, 0
    %p256 = por %p254, %p255
    %s257 = ssub.s32 %s26, %s33
    %p258 = scmp.eq.s32.totalorder %s257, 0
    %s260 = sadd.s32 %s259, 1
    %s261 = scalar_select %p258, %s259, %s260
    %p264 = pneg %p258
    %p265 = scmp.eq.s32.totalorder %s18, 3
    %p266 = por %p264, %p265
    %p267 = scmp.ne.s32.totalorder %s259, %s262
    %p268 = scmp.eq.s32.totalorder %s18, 0
    %p269 = por %p267, %p268
    %p270 = scmp.ne.s32.totalorder %s259, %s262
    %p271 = scmp.eq.s32.totalorder %s23, 3
    %p272 = por %p270, %p271
    %p273 = scmp.ne.s32.totalorder %s262, %s263
    %p274 = scmp.eq.s32.totalorder %s23, 0
    %p275 = por %p273, %p274
    %p276 = scmp.ne.s32.totalorder %s262, %s263
    %p277 = scmp.eq.s32.totalorder %s24, 3
    %p278 = por %p276, %p277
    %p280 = scmp.ne.s32.totalorder %s263, %s279
    %p281 = scmp.eq.s32.totalorder %s24, 0
    %p282 = por %p280, %p281
    %s283 = ssub.s32 %s26, %s33
    %p284 = scmp.eq.s32.totalorder %s283, 0
    %s286 = sadd.s32 %s285, 1
    %s287 = scalar_select %p284, %s285, %s286
    %p290 = pneg %p284
    %p291 = scmp.eq.s32.totalorder %s18, 3
    %p292 = por %p290, %p291
    %p293 = scmp.ne.s32.totalorder %s285, %s288
    %p294 = scmp.eq.s32.totalorder %s18, 0
    %p295 = por %p293, %p294
    %p296 = scmp.ne.s32.totalorder %s285, %s288
    %p297 = scmp.eq.s32.totalorder %s23, 3
    %p298 = por %p296, %p297
    %p299 = scmp.ne.s32.totalorder %s288, %s289
    %p300 = scmp.eq.s32.totalorder %s23, 0
    %p301 = por %p299, %p300
    %p302 = scmp.ne.s32.totalorder %s288, %s289
    %p303 = scmp.eq.s32.totalorder %s24, 3
    %p304 = por %p302, %p303
    %p306 = scmp.ne.s32.totalorder %s289, %s305
    %p307 = scmp.eq.s32.totalorder %s24, 0
    %p308 = por %p306, %p307
    %s309 = ssub.s32 %s26, %s33
    %p310 = scmp.eq.s32.totalorder %s309, 0
    %s312 = sadd.s32 %s311, 1
    %s313 = scalar_select %p310, %s311, %s312
    %p316 = pneg %p310
    %p317 = scmp.eq.s32.totalorder %s18, 3
    %p318 = por %p316, %p317
    %p319 = scmp.ne.s32.totalorder %s311, %s314
    %p320 = scmp.eq.s32.totalorder %s18, 0
    %p321 = por %p319, %p320
    %p322 = scmp.ne.s32.totalorder %s311, %s314
    %p323 = scmp.eq.s32.totalorder %s23, 3
    %p324 = por %p322, %p323
    %p325 = scmp.ne.s32.totalorder %s314, %s315
    %p326 = scmp.eq.s32.totalorder %s23, 0
    %p327 = por %p325, %p326
    %p328 = scmp.ne.s32.totalorder %s314, %s315
    %p329 = scmp.eq.s32.totalorder %s24, 3
    %p330 = por %p328, %p329
    %p332 = scmp.ne.s32.totalorder %s315, %s331
    %p333 = scmp.eq.s32.totalorder %s24, 0
    %p334 = por %p332, %p333
    %s335 = ssub.s32 %s25, %s37
    %p336 = scmp.eq.s32.totalorder %s335, 0
    %s338 = sadd.s32 %s337, 1
    %s339 = scalar_select %p336, %s337, %s338
    %p342 = pneg %p336
    %p343 = scmp.eq.s32.totalorder %s18, 3
    %p344 = por %p342, %p343
    %p345 = scmp.ne.s32.totalorder %s337, %s340
    %p346 = scmp.eq.s32.totalorder %s18, 0
    %p347 = por %p345, %p346
    %p348 = scmp.ne.s32.totalorder %s337, %s340
    %p349 = scmp.eq.s32.totalorder %s23, 3
    %p350 = por %p348, %p349
    %p351 = scmp.ne.s32.totalorder %s340, %s341
    %p352 = scmp.eq.s32.totalorder %s23, 0
    %p353 = por %p351, %p352
    %p354 = scmp.ne.s32.totalorder %s340, %s341
    %p355 = scmp.eq.s32.totalorder %s24, 3
    %p356 = por %p354, %p355
    %p358 = scmp.ne.s32.totalorder %s341, %s357
    %p359 = scmp.eq.s32.totalorder %s24, 0
    %p360 = por %p358, %p359
    %p361 = scmp.le.s32.totalorder 1, %s18
    %p362 = scmp.lt.s32.totalorder %s18, 5
    %p363 = pnand %p361, %p362
    %p364 = pneg %p363
    // Predicated region
    $region9: #{decode_layer_forward.1} parent=5 // pred_check
      _
    $region10: #{decode_layer_forward.1} parent=5 // pred_check_branch
      %366 = sbr.rel (%p363) target = $region12
    $region11: #{decode_layer_forward.1} parent=5 // pred_region
      %s367 = ssub.s32 %s18, 1
      // Predicated region
      $region13: #{decode_layer_forward.1} parent=11 // pred_check
        %p368 = pneg %p77
      $region14: #{decode_layer_forward.1} parent=11 // pred_check_branch
        %370 = sbr.rel (%p368) target = $region16
      $region15: #{decode_layer_forward.1} parent=11 // pred_region
        _
      $region16: #{decode_layer_forward.1} parent=11 // pred_fallthru
        _
      // Predicated region
      $region17: #{decode_layer_forward.1} parent=11 // pred_check
        %p371 = pneg %p98
      $region18: #{decode_layer_forward.1} parent=11 // pred_check_branch
        %373 = sbr.rel (%p371) target = $region20
      $region19: #{decode_layer_forward.1} parent=11 // pred_region
        _
      $region20: #{decode_layer_forward.1} parent=11 // pred_fallthru
        _
      // Predicated region
      $region21: #{decode_layer_forward.1} parent=11 // pred_check
        %p374 = pneg %p119
      $region22: #{decode_layer_forward.1} parent=11 // pred_check_branch
        %376 = sbr.rel (%p374) target = $region24
      $region23: #{decode_layer_forward.1} parent=11 // pred_region
        _
      $region24: #{decode_layer_forward.1} parent=11 // pred_fallthru
        _
    $region12: #{decode_layer_forward.1} parent=5 // pred_fallthru
      _
    %p377 = scmp.lt.s32.totalorder %s18, 4
    // Predicated region
    $region25: #{decode_layer_forward.1} parent=5 // pred_check
      %p378 = pneg %p377
    $region26: #{decode_layer_forward.1} parent=5 // pred_check_branch
      %380 = sbr.rel (%p378) target = $region28
    $region27: #{decode_layer_forward.1} parent=5 // pred_region
      // Predicated region
      $region29: #{decode_layer_forward.1} parent=27 // pred_check
        %p381 = pneg %p50
      $region30: #{decode_layer_forward.1} parent=27 // pred_check_branch
        %383 = sbr.rel (%p381) target = $region32
      $region31: #{decode_layer_forward.1} parent=27 // pred_region
        %s384 = smul.u32 2, %s25
        %p385 = scmp.lt.s32.totalorder %s384, 3
        %s386 = scalar_select %p385, %s384, 3
        %s387 = smul.addr %s386, 2
        %s388 = smul.addr %s387, 4
        %s389 = scalar_lea.vmem %s0, %s388
        %s390 = smul.u32 2, %s25
      $region32: #{decode_layer_forward.1} parent=27 // pred_fallthru
        _
      // Predicated region
      $region33: #{decode_layer_forward.1} parent=27 // pred_check
        %p391 = pneg %p139
      $region34: #{decode_layer_forward.1} parent=27 // pred_check_branch
        %393 = sbr.rel (%p391) target = $region36
      $region35: #{decode_layer_forward.1} parent=27 // pred_region
        %p394 = scmp.lt.s32.totalorder %s26, 1
        %s395 = scalar_select %p394, %s26, 1
        %s396 = smul.addr %s395, 16
        %s397 = smul.addr %s396, 4
        %s398 = scalar_lea.vmem %s4, %s397
      $region36: #{decode_layer_forward.1} parent=27 // pred_fallthru
        _
      // Predicated region
      $region37: #{decode_layer_forward.1} parent=27 // pred_check
        %p399 = pneg %p165
      $region38: #{decode_layer_forward.1} parent=27 // pred_check_branch
        %401 = sbr.rel (%p399) target = $region40
      $region39: #{decode_layer_forward.1} parent=27 // pred_region
        %p402 = scmp.lt.s32.totalorder %s26, 1
        %s403 = scalar_select %p402, %s26, 1
        %s404 = scalar_lea.vmem %s5, %s403
      $region40: #{decode_layer_forward.1} parent=27 // pred_fallthru
        _
      // Predicated region
      $region41: #{decode_layer_forward.1} parent=27 // pred_check
        %p405 = pneg %p191
      $region42: #{decode_layer_forward.1} parent=27 // pred_check_branch
        %407 = sbr.rel (%p405) target = $region44
      $region43: #{decode_layer_forward.1} parent=27 // pred_region
        %p408 = scmp.lt.s32.totalorder %s26, 1
        %s409 = scalar_select %p408, %s26, 1
        %s410 = smul.addr %s409, 16
        %s411 = smul.addr %s410, 4
        %s412 = scalar_lea.vmem %s6, %s411
      $region44: #{decode_layer_forward.1} parent=27 // pred_fallthru
        _
      // Predicated region
      $region45: #{decode_layer_forward.1} parent=27 // pred_check
        %p413 = pneg %p217
      $region46: #{decode_layer_forward.1} parent=27 // pred_check_branch
        %415 = sbr.rel (%p413) target = $region48
      $region47: #{decode_layer_forward.1} parent=27 // pred_region
        %p416 = scmp.lt.s32.totalorder %s26, 1
        %s417 = scalar_select %p416, %s26, 1
        %s418 = scalar_lea.vmem %s7, %s417
      $region48: #{decode_layer_forward.1} parent=27 // pred_fallthru
        _
      // Predicated region
      $region49: #{decode_layer_forward.1} parent=27 // pred_check
        %p419 = pneg %p243
      $region50: #{decode_layer_forward.1} parent=27 // pred_check_branch
        %421 = sbr.rel (%p419) target = $region52
      $region51: #{decode_layer_forward.1} parent=27 // pred_region
        %p422 = scmp.lt.s32.totalorder %s26, 1
        %s423 = scalar_select %p422, %s26, 1
        %s424 = smul.addr %s423, 64
        %s425 = smul.addr %s424, 4
        %s426 = scalar_lea.vmem %s8, %s425
      $region52: #{decode_layer_forward.1} parent=27 // pred_fallthru
        _
      // Predicated region
      $region53: #{decode_layer_forward.1} parent=27 // pred_check
        %p427 = pneg %p269
      $region54: #{decode_layer_forward.1} parent=27 // pred_check_branch
        %429 = sbr.rel (%p427) target = $region56
      $region55: #{decode_layer_forward.1} parent=27 // pred_region
        %p430 = scmp.lt.s32.totalorder %s26, 1
        %s431 = scalar_select %p430, %s26, 1
        %s432 = smul.addr %s431, 4
        %s433 = scalar_lea.vmem %s9, %s432
      $region56: #{decode_layer_forward.1} parent=27 // pred_fallthru
        _
      // Predicated region
      $region57: #{decode_layer_forward.1} parent=27 // pred_check
        %p434 = pneg %p295
      $region58: #{decode_layer_forward.1} parent=27 // pred_check_branch
        %436 = sbr.rel (%p434) target = $region60
      $region59: #{decode_layer_forward.1} parent=27 // pred_region
        %p437 = scmp.lt.s32.totalorder %s26, 1
        %s438 = scalar_select %p437, %s26, 1
        %s439 = smul.addr %s438, 64
        %s440 = smul.addr %s439, 4
        %s441 = scalar_lea.vmem %s10, %s440
      $region60: #{decode_layer_forward.1} parent=27 // pred_fallthru
        _
      // Predicated region
      $region61: #{decode_layer_forward.1} parent=27 // pred_check
        %p442 = pneg %p321
      $region62: #{decode_layer_forward.1} parent=27 // pred_check_branch
        %444 = sbr.rel (%p442) target = $region64
      $region63: #{decode_layer_forward.1} parent=27 // pred_region
        %p445 = scmp.lt.s32.totalorder %s26, 1
        %s446 = scalar_select %p445, %s26, 1
        %s447 = scalar_lea.vmem %s11, %s446
      $region64: #{decode_layer_forward.1} parent=27 // pred_fallthru
        _
    $region28: #{decode_layer_forward.1} parent=5 // pred_fallthru
      _
    %p448 = scmp.le.s32.totalorder 1, %s18
    %p449 = scmp.lt.s32.totalorder %s18, 5
    %p450 = pnand %p448, %p449
    %p451 = pneg %p450
    // Predicated region
    $region65: #{decode_layer_forward.1} parent=5 // pred_check
      _
    $region66: #{decode_layer_forward.1} parent=5 // pred_check_branch
      %453 = sbr.rel (%p450) target = $region68
    $region67: #{decode_layer_forward.1} parent=5 // pred_region
      %s454 = ssub.s32 %s18, 1
      %s455 = smul.u32 2, %s27
      %p456 = scmp.lt.s32.totalorder %s455, 3
      %s457 = scalar_select %p456, %s455, 3
      %s458 = smul.addr %s457, 2
      %s459 = smul.addr %s458, 4
      %s460 = scalar_lea.vmem %s0, %s459
      %p461 = pneg %p56
      %p462 = pneg %p53
      %p463 = pneg %p77
      %p464 = pneg %p74
      %p465 = pneg %p98
      %p466 = pneg %p95
      %p467 = pneg %p119
      %p468 = pneg %p116
      %p469 = scmp.lt.s32.totalorder %s28, 1
      %s470 = scalar_select %p469, %s28, 1
      %s471 = smul.addr %s470, 16
      %s472 = smul.addr %s471, 4
      %s473 = scalar_lea.vmem %s4, %s472
      %p474 = pneg %p145
      %p475 = pneg %p142
      %p476 = scmp.lt.s32.totalorder %s28, 1
      %s477 = scalar_select %p476, %s28, 1
      %s478 = scalar_lea.vmem %s5, %s477
      %p479 = pneg %p171
      %p480 = pneg %p168
      %p481 = scmp.lt.s32.totalorder %s28, 1
      %s482 = scalar_select %p481, %s28, 1
      %s483 = smul.addr %s482, 16
      %s484 = smul.addr %s483, 4
      %s485 = scalar_lea.vmem %s6, %s484
      %p486 = pneg %p197
      %p487 = pneg %p194
      %p488 = scmp.lt.s32.totalorder %s28, 1
      %s489 = scalar_select %p488, %s28, 1
      %s490 = scalar_lea.vmem %s7, %s489
      %p491 = pneg %p223
      %p492 = pneg %p220
      %p493 = scmp.lt.s32.totalorder %s28, 1
      %s494 = scalar_select %p493, %s28, 1
      %s495 = smul.addr %s494, 64
      %s496 = smul.addr %s495, 4
      %s497 = scalar_lea.vmem %s8, %s496
      %p498 = pneg %p249
      %p499 = pneg %p246
      %p500 = scmp.lt.s32.totalorder %s28, 1
      %s501 = scalar_select %p500, %s28, 1
      %s502 = smul.addr %s501, 4
      %s503 = scalar_lea.vmem %s9, %s502
      %p504 = pneg %p275
      %p505 = pneg %p272
      %p506 = scmp.lt.s32.totalorder %s28, 1
      %s507 = scalar_select %p506, %s28, 1
      %s508 = smul.addr %s507, 64
      %s509 = smul.addr %s508, 4
      %s510 = scalar_lea.vmem %s10, %s509
      %p511 = pneg %p301
      %p512 = pneg %p298
      %p513 = scmp.lt.s32.totalorder %s28, 1
      %s514 = scalar_select %p513, %s28, 1
      %s515 = scalar_lea.vmem %s11, %s514
      %p516 = pneg %p327
      %p517 = pneg %p324
      %p518 = pneg %p353
      %p519 = pneg %p350
      %s520 = smul.u32 2, %s27
      %p521 = scmp.lt.s32.totalorder %s520, 3
      %s522 = scalar_select %p521, %s520, 3
      %s523 = smul.addr %s522, 8
      %s524 = scalar_lea.vmem %s12, %s523
      %s525 = smul.u32 2, %s27
      %p526 = scmp.lt.s32.totalorder %s525, 3
      %s527 = scalar_select %p526, %s525, 3
      %s528 = smul.addr %s527, 2
      %s529 = smul.addr %s528, 4
      %s530 = scalar_lea.vmem %s0, %s529
      %s531 = smul.u32 2, %s27
      %p532 = scmp.lt.s32.totalorder %s28, 1
      %s533 = scalar_select %p532, %s28, 1
      %s534 = smul.addr %s533, 16
      %s535 = smul.addr %s534, 4
      %s536 = scalar_lea.vmem %s4, %s535
      %p537 = scmp.lt.s32.totalorder %s28, 1
      %s538 = scalar_select %p537, %s28, 1
      %s539 = scalar_lea.vmem %s5, %s538
      %p540 = scmp.lt.s32.totalorder %s28, 1
      %s541 = scalar_select %p540, %s28, 1
      %s542 = smul.addr %s541, 16
      %s543 = smul.addr %s542, 4
      %s544 = scalar_lea.vmem %s6, %s543
      %p545 = scmp.lt.s32.totalorder %s28, 1
      %s546 = scalar_select %p545, %s28, 1
      %s547 = scalar_lea.vmem %s7, %s546
      %p548 = scmp.lt.s32.totalorder %s28, 1
      %s549 = scalar_select %p548, %s28, 1
      %s550 = smul.addr %s549, 64
      %s551 = smul.addr %s550, 4
      %s552 = scalar_lea.vmem %s8, %s551
      %p553 = scmp.lt.s32.totalorder %s28, 1
      %s554 = scalar_select %p553, %s28, 1
      %s555 = smul.addr %s554, 4
      %s556 = scalar_lea.vmem %s9, %s555
      %p557 = scmp.lt.s32.totalorder %s28, 1
      %s558 = scalar_select %p557, %s28, 1
      %s559 = smul.addr %s558, 64
      %s560 = smul.addr %s559, 4
      %s561 = scalar_lea.vmem %s10, %s560
      %p562 = scmp.lt.s32.totalorder %s28, 1
      %s563 = scalar_select %p562, %s28, 1
      %s564 = scalar_lea.vmem %s11, %s563
      %s565 = smul.u32 2, %s27
      %p566 = scmp.lt.s32.totalorder %s565, 3
      %s567 = scalar_select %p566, %s565, 3
      %s568 = smul.addr %s567, 8
      %s569 = scalar_lea.vmem %s12, %s568
      %s570 = smul.u32 2, %s27
      %p571 = scmp.eq.s32.totalorder %s28, 0
      // Predicated region
      $region69: #{decode_layer_forward.1} parent=67 // pred_check
        %p572 = pneg %p571
      $region70: #{decode_layer_forward.1} parent=67 // pred_check_branch
        %574 = sbr.rel (%p572) target = $region72
      $region71: #{decode_layer_forward.1} parent=67 // pred_region
        %v575 = vld [vmem:[%s530] sm:$0xff]
        %v576 = vld [vmem:[%s530 + $0x8] sm:$0xff]
        %v577 = vld [vmem:[%s1] sm:$0xf]
        %v578 = vld [vmem:[%s1 + $0x4] sm:$0xf]
        %v579 = vld [vmem:[%s1 + $0x8] sm:$0xf]
        %v580 = vld [vmem:[%s1 + $0xc] sm:$0xf]
        %v581 = vld [vmem:[%s1 + $0x10] sm:$0xf]
        %v582 = vld [vmem:[%s1 + $0x14] sm:$0xf]
        %v583 = vld [vmem:[%s1 + $0x18] sm:$0xf]
        %v584 = vld [vmem:[%s1 + $0x1c] sm:$0xf]
        %v585 = vld [vmem:[%s1 + $0x20] sm:$0xf]
        %v586 = vld [vmem:[%s1 + $0x24] sm:$0xf]
        %v587 = vld [vmem:[%s1 + $0x28] sm:$0xf]
        %v588 = vld [vmem:[%s1 + $0x2c] sm:$0xf]
        %v589 = vld [vmem:[%s1 + $0x30] sm:$0xf]
        %v590 = vld [vmem:[%s1 + $0x34] sm:$0xf]
        %v591 = vld [vmem:[%s1 + $0x38] sm:$0xf]
        %v592 = vld [vmem:[%s1 + $0x3c] sm:$0xf]
        %v593 = vld [vmem:[%s1 + $0x40] sm:$0xf]
        %v594 = vld [vmem:[%s1 + $0x44] sm:$0xf]
        %v595 = vld [vmem:[%s1 + $0x48] sm:$0xf]
        %v596 = vld [vmem:[%s1 + $0x4c] sm:$0xf]
        %v597 = vld [vmem:[%s1 + $0x50] sm:$0xf]
        %v598 = vld [vmem:[%s1 + $0x54] sm:$0xf]
        %v599 = vld [vmem:[%s1 + $0x58] sm:$0xf]
        %v600 = vld [vmem:[%s1 + $0x5c] sm:$0xf]
        %v601 = vld [vmem:[%s1 + $0x60] sm:$0xf]
        %v602 = vld [vmem:[%s1 + $0x64] sm:$0xf]
        %v603 = vld [vmem:[%s1 + $0x68] sm:$0xf]
        %v604 = vld [vmem:[%s1 + $0x6c] sm:$0xf]
        %v605 = vld [vmem:[%s1 + $0x70] sm:$0xf]
        %v606 = vld [vmem:[%s1 + $0x74] sm:$0xf]
        %v607 = vld [vmem:[%s1 + $0x78] sm:$0xf]
        %v608 = vld [vmem:[%s1 + $0x7c] sm:$0xf]
        %v611 = vunpack.c.l.b16 %v575
        %v612 = vunpack.c.h.b16 %v575
        %v613 = vunpack.c.l.b16 %v576
        %v614 = vunpack.c.h.b16 %v576
        %v615 = vpack.c.b16 %v613, %v611
        %v616 = vpack.c.b16 %v614, %v612
        %v651 = vunpack.c.l.b16 %v577
        %v652 = vunpack.c.l.b16 %v578
        %v653 = vunpack.c.l.b16 %v579
        %v654 = vunpack.c.l.b16 %v580
        %v655 = vunpack.c.l.b16 %v581
        %v656 = vunpack.c.l.b16 %v582
        %v657 = vunpack.c.l.b16 %v583
        %v658 = vunpack.c.l.b16 %v584
        %v659 = vunpack.c.l.b16 %v585
        %v660 = vunpack.c.l.b16 %v586
        %v661 = vunpack.c.l.b16 %v587
        %v662 = vunpack.c.l.b16 %v588
        %v663 = vunpack.c.l.b16 %v589
        %v664 = vunpack.c.l.b16 %v590
        %v665 = vunpack.c.l.b16 %v591
        %v666 = vunpack.c.l.b16 %v592
        %v667 = vunpack.c.l.b16 %v593
        %v668 = vunpack.c.l.b16 %v594
        %v669 = vunpack.c.l.b16 %v595
        %v670 = vunpack.c.l.b16 %v596
        %v671 = vunpack.c.l.b16 %v597
        %v672 = vunpack.c.l.b16 %v598
        %v673 = vunpack.c.l.b16 %v599
        %v674 = vunpack.c.l.b16 %v600
        %v675 = vunpack.c.l.b16 %v601
        %v676 = vunpack.c.l.b16 %v602
        %v677 = vunpack.c.l.b16 %v603
        %v678 = vunpack.c.l.b16 %v604
        %v679 = vunpack.c.l.b16 %v605
        %v680 = vunpack.c.l.b16 %v606
        %v681 = vunpack.c.l.b16 %v607
        %v682 = vunpack.c.l.b16 %v608
        %v683 = vpack.c.b16 %v652, %v651
        %v684 = vpack.c.b16 %v654, %v653
        %v685 = vpack.c.b16 %v656, %v655
        %v686 = vpack.c.b16 %v658, %v657
        %v687 = vpack.c.b16 %v660, %v659
        %v688 = vpack.c.b16 %v662, %v661
        %v689 = vpack.c.b16 %v664, %v663
        %v690 = vpack.c.b16 %v666, %v665
        %v691 = vpack.c.b16 %v668, %v667
        %v692 = vpack.c.b16 %v670, %v669
        %v693 = vpack.c.b16 %v672, %v671
        %v694 = vpack.c.b16 %v674, %v673
        %v695 = vpack.c.b16 %v676, %v675
        %v696 = vpack.c.b16 %v678, %v677
        %v697 = vpack.c.b16 %v680, %v679
        %v698 = vpack.c.b16 %v682, %v681
        %715 = vmatpush.bf16.msra.mxu0 %v690
        %716 = vmatpush.bf16.msra.mxu0 %v689
        %717 = vmatpush.bf16.msra.mxu0 %v688
        %718 = vmatpush.bf16.msra.mxu0 %v687
        %719 = vmatpush.bf16.msra.mxu0 %v686
        %720 = vmatpush.bf16.msra.mxu0 %v685
        %721 = vmatpush.bf16.msra.mxu0 %v684
        %722 = vmatpush.bf16.msra.mxu0 %v683
        %723 = vmatmul.bf16.gmra.mxu0 %v615
        %v724 = vpop.f32.mrf.mxu0
        %v725 = vadd.f32 0.0, %v724
        %v726 = vpop.f32.mrf.mxu0
        %v727 = vadd.f32 0.0, %v726
        %728 = vdwg.mxu0
        %729 = vmatpush.bf16.msra.mxu0 %v698
        %730 = vmatpush.bf16.msra.mxu0 %v697
        %731 = vmatpush.bf16.msra.mxu0 %v696
        %732 = vmatpush.bf16.msra.mxu0 %v695
        %733 = vmatpush.bf16.msra.mxu0 %v694
        %734 = vmatpush.bf16.msra.mxu0 %v693
        %735 = vmatpush.bf16.msra.mxu0 %v692
        %736 = vmatpush.bf16.msra.mxu0 %v691
        %737 = vmatmul.bf16.gmra.mxu0 %v616
        %v738 = vpop.f32.mrf.mxu0
        %v739 = vadd.f32 %v725, %v738
        %v740 = vpop.f32.mrf.mxu0
        %v741 = vadd.f32 %v727, %v740
        %742 = vdwg.mxu0
        %743 = vst [vmem:[%s569] sm:$0xff] %v739
        %744 = vst [vmem:[%s569 + $0x8] sm:$0xff] %v741
      $region72: #{decode_layer_forward.1} parent=67 // pred_fallthru
        _
      %v745 = vld [vmem:[%s569] sm:$0xff]
      %v746 = vld [vmem:[%s569 + $0x8] sm:$0xff]
      %v747 = vld [vmem:[%s2] sm:$0xff]
      %v748 = vld [vmem:[%s2 + $0x8] sm:$0xff]
      %v749 = vld [vmem:[%s2 + $0x10] sm:$0xff]
      %v750 = vld [vmem:[%s2 + $0x18] sm:$0xff]
      %v751 = vld [vmem:[%s2 + $0x20] sm:$0xff]
      %v752 = vld [vmem:[%s2 + $0x28] sm:$0xff]
      %v753 = vld [vmem:[%s2 + $0x30] sm:$0xff]
      %v754 = vld [vmem:[%s2 + $0x38] sm:$0xff]
      %v755 = vld [vmem:[%s2 + $0x40] sm:$0xff]
      %v756 = vld [vmem:[%s2 + $0x48] sm:$0xff]
      %v757 = vld [vmem:[%s2 + $0x50] sm:$0xff]
      %v758 = vld [vmem:[%s2 + $0x58] sm:$0xff]
      %v759 = vld [vmem:[%s2 + $0x60] sm:$0xff]
      %v760 = vld [vmem:[%s2 + $0x68] sm:$0xff]
      %v761 = vld [vmem:[%s2 + $0x70] sm:$0xff]
      %v762 = vld [vmem:[%s2 + $0x78] sm:$0xff]
      %v763 = vld [vmem:[%s3] sm:$0xff]
      %v764 = vld [vmem:[%s3 + $0x8] sm:$0xff]
      %765 = vmatpush.msra.mxu0 %v762
      %766 = vmatpush.msra.mxu0 %v761
      %767 = vmatpush.msra.mxu0 %v760
      %768 = vmatpush.msra.mxu0 %v759
      %769 = vmatpush.msra.mxu0 %v758
      %770 = vmatpush.msra.mxu0 %v757
      %771 = vmatpush.msra.mxu0 %v756
      %772 = vmatpush.msra.mxu0 %v755
      %773 = vmatpush.msra.mxu0 %v754
      %774 = vmatpush.msra.mxu0 %v753
      %775 = vmatpush.msra.mxu0 %v752
      %776 = vmatpush.msra.mxu0 %v751
      %777 = vmatpush.msra.mxu0 %v750
      %778 = vmatpush.msra.mxu0 %v749
      %779 = vmatpush.msra.mxu0 %v748
      %780 = vmatpush.msra.mxu0 %v747
      %781 = vmatmul.f32.gmra.mxu0 %v745
      %v782 = vpop.f32.mrf.mxu0
      %v783 = vadd.f32 0.0, %v782
      %784 = vmatmul.f32.gmra.mxu0 %v746
      %v785 = vpop.f32.mrf.mxu0
      %v786 = vadd.f32 0.0, %v785
      %787 = vdwg.mxu0
      %vm788 = vcmask 130048
      %v790 = vsel %vm788, %v783, 0
      %v793 = vsel %vm788, %v786, 0
      %795 = vmatpush.msra.mxu0 0.0
      %796 = vmatpush.msra.mxu0 0.0
      %797 = vmatpush.msra.mxu0 0.0
      %798 = vmatpush.msra.mxu0 0.0
      %799 = vmatpush.msra.mxu0 0.0
      %800 = vmatpush.msra.mxu0 0.0
      %801 = vmatpush.msra.mxu0 0.0
      %802 = vmatpush.msra.mxu0 0.0
      %803 = vmatpush.msra.mxu0 0.0
      %804 = vmatpush.msra.mxu0 0.0
      %805 = vmatpush.msra.mxu0 0.0
      %806 = vmatpush.msra.mxu0 0.0
      %807 = vmatpush.msra.mxu0 0.0
      %808 = vmatpush.msra.mxu0 0.0
      %809 = vmatpush.msra.mxu0 %v764
      %810 = vmatpush.msra.mxu0 %v763
      %811 = vmatmul.f32.gmra.mxu0 %v790
      %v812 = vpop.f32.mrf.mxu0
      %v813 = vadd.f32 0.0, %v812
      %814 = vmatmul.f32.gmra.mxu0 %v793
      %v815 = vpop.f32.mrf.mxu0
      %v816 = vadd.f32 0.0, %v815
      %817 = vdwg.mxu0
      %v818 = vsub.f32 %v745, %v813
      %v819 = vsub.f32 %v746, %v816
      %v820 = vmul.f32 %v818, %v818
      %v821 = vmul.f32 %v819, %v819
      %822 = vmatpush.msra.mxu0 %v762
      %823 = vmatpush.msra.mxu0 %v761
      %824 = vmatpush.msra.mxu0 %v760
      %825 = vmatpush.msra.mxu0 %v759
      %826 = vmatpush.msra.mxu0 %v758
      %827 = vmatpush.msra.mxu0 %v757
      %828 = vmatpush.msra.mxu0 %v756
      %829 = vmatpush.msra.mxu0 %v755
      %830 = vmatpush.msra.mxu0 %v754
      %831 = vmatpush.msra.mxu0 %v753
      %832 = vmatpush.msra.mxu0 %v752
      %833 = vmatpush.msra.mxu0 %v751
      %834 = vmatpush.msra.mxu0 %v750
      %835 = vmatpush.msra.mxu0 %v749
      %836 = vmatpush.msra.mxu0 %v748
      %837 = vmatpush.msra.mxu0 %v747
      %838 = vmatmul.f32.gmra.mxu0 %v820
      %v839 = vpop.f32.mrf.mxu0
      %v840 = vadd.f32 1e-05, %v839
      %841 = vmatmul.f32.gmra.mxu0 %v821
      %v842 = vpop.f32.mrf.mxu0
      %v843 = vadd.f32 1e-05, %v842
      %844 = vdwg.mxu0
      %v845 = vrsqrt.pop %v840
      %v846 = vmul.f32 %v845, %v840
      %v847 = vmul.f32 %v846, %v845
      %v848 = vmul.f32 0.5, %v847
      %v849 = vsub.f32 1.5, %v848
      %v850 = vmul.f32 %v845, %v849
      %vm851 = vweird.f32 %v840
      %vm852 = vweird.f32 %v845
      %vm853 = vmor %vm851, %vm852
      %v854 = vsel %vm853, %v845, %v850
      %v855 = vrsqrt.pop %v843
      %v856 = vmul.f32 %v855, %v843
      %v857 = vmul.f32 %v856, %v855
      %v858 = vmul.f32 0.5, %v857
      %v859 = vsub.f32 1.5, %v858
      %v860 = vmul.f32 %v855, %v859
      %vm861 = vweird.f32 %v843
      %vm862 = vweird.f32 %v855
      %vm863 = vmor %vm861, %vm862
      %v864 = vsel %vm863, %v855, %v860
      %v866 = vsel %vm788, %v854, 0
      %v869 = vsel %vm788, %v864, 0
      %871 = vmatpush.msra.mxu0 0.0
      %872 = vmatpush.msra.mxu0 0.0
      %873 = vmatpush.msra.mxu0 0.0
      %874 = vmatpush.msra.mxu0 0.0
      %875 = vmatpush.msra.mxu0 0.0
      %876 = vmatpush.msra.mxu0 0.0
      %877 = vmatpush.msra.mxu0 0.0
      %878 = vmatpush.msra.mxu0 0.0
      %879 = vmatpush.msra.mxu0 0.0
      %880 = vmatpush.msra.mxu0 0.0
      %881 = vmatpush.msra.mxu0 0.0
      %882 = vmatpush.msra.mxu0 0.0
      %883 = vmatpush.msra.mxu0 0.0
      %884 = vmatpush.msra.mxu0 0.0
      %885 = vmatpush.msra.mxu0 %v764
      %886 = vmatpush.msra.mxu0 %v763
      %887 = vmatmul.f32.gmra.mxu0 %v866
      %v888 = vpop.f32.mrf.mxu0
      %v889 = vadd.f32 0.0, %v888
      %890 = vmatmul.f32.gmra.mxu0 %v869
      %v891 = vpop.f32.mrf.mxu0
      %v892 = vadd.f32 0.0, %v891
      %893 = vdwg.mxu0
      %v894 = vmul.f32 %v818, %v889
      %v895 = vmul.f32 %v819, %v892
      %v896 = vpack.c.bf16 %v895, %v894
      %v897 = vld [vmem:[%s536] sm:$0xf]
      %v898 = vld [vmem:[%s536 + $0x4] sm:$0xf]
      %v899 = vld [vmem:[%s536 + $0x8] sm:$0xf]
      %v900 = vld [vmem:[%s536 + $0xc] sm:$0xf]
      %v901 = vld [vmem:[%s536 + $0x10] sm:$0xf]
      %v902 = vld [vmem:[%s536 + $0x14] sm:$0xf]
      %v903 = vld [vmem:[%s536 + $0x18] sm:$0xf]
      %v904 = vld [vmem:[%s536 + $0x1c] sm:$0xf]
      %v905 = vld [vmem:[%s536 + $0x20] sm:$0xf]
      %v906 = vld [vmem:[%s536 + $0x24] sm:$0xf]
      %v907 = vld [vmem:[%s536 + $0x28] sm:$0xf]
      %v908 = vld [vmem:[%s536 + $0x2c] sm:$0xf]
      %v909 = vld [vmem:[%s536 + $0x30] sm:$0xf]
      %v910 = vld [vmem:[%s536 + $0x34] sm:$0xf]
      %v911 = vld [vmem:[%s536 + $0x38] sm:$0xf]
      %v912 = vld [vmem:[%s536 + $0x3c] sm:$0xf]
      %v913 = vld [vmem:[%s539] sm:$0x1]
      %v915 = vperm.slane %v913, 0
      %v933 = vunpack.c.l.b16 %v897
      %v934 = vunpack.c.l.b16 %v898
      %v935 = vunpack.c.l.b16 %v899
      %v936 = vunpack.c.l.b16 %v900
      %v937 = vunpack.c.l.b16 %v901
      %v938 = vunpack.c.l.b16 %v902
      %v939 = vunpack.c.l.b16 %v903
      %v940 = vunpack.c.l.b16 %v904
      %v941 = vunpack.c.l.b16 %v905
      %v942 = vunpack.c.l.b16 %v906
      %v943 = vunpack.c.l.b16 %v907
      %v944 = vunpack.c.l.b16 %v908
      %v945 = vunpack.c.l.b16 %v909
      %v946 = vunpack.c.l.b16 %v910
      %v947 = vunpack.c.l.b16 %v911
      %v948 = vunpack.c.l.b16 %v912
      %v949 = vpack.c.b16 %v934, %v933
      %v950 = vpack.c.b16 %v936, %v935
      %v951 = vpack.c.b16 %v938, %v937
      %v952 = vpack.c.b16 %v940, %v939
      %v953 = vpack.c.b16 %v942, %v941
      %v954 = vpack.c.b16 %v944, %v943
      %v955 = vpack.c.b16 %v946, %v945
      %v956 = vpack.c.b16 %v948, %v947
      %965 = vmatpush.bf16.msra.mxu0 %v956
      %966 = vmatpush.bf16.msra.mxu0 %v955
      %967 = vmatpush.bf16.msra.mxu0 %v954
      %968 = vmatpush.bf16.msra.mxu0 %v953
      %969 = vmatpush.bf16.msra.mxu0 %v952
      %970 = vmatpush.bf16.msra.mxu0 %v951
      %971 = vmatpush.bf16.msra.mxu0 %v950
      %972 = vmatpush.bf16.msra.mxu0 %v949
      %973 = vmatmul.bf16.gmra.mxu0 %v896
      %v974 = vpop.f32.mrf.mxu0
      %v975 = vadd.f32 %v915, %v974
      %v976 = vpop.f32.mrf.mxu0
      %v977 = vadd.f32 %v915, %v976
      %978 = vdwg.mxu0
      %v979 = vpack.c.bf16 %v975, %v975
      %v980 = vpack.c.bf16 %v977, %v977
      %v981 = vunpack.c.l.bf16 %v979
      %v982 = vunpack.c.l.bf16 %v980
      %v983 = vmul.f32 %v981, 0.5
      %v984 = vmul.f32 %v982, 0.5
      %v985 = vpack.c.bf16 %v983, %v983
      %v986 = vpack.c.bf16 %v984, %v984
      %v987 = vmul.f32 %v981, %v981
      %v988 = vmul.f32 %v982, %v982
      %v989 = vpack.c.bf16 %v987, %v987
      %v990 = vpack.c.bf16 %v988, %v988
      %v991 = vunpack.c.l.bf16 %v989
      %v992 = vunpack.c.l.bf16 %v990
      %v993 = vmul.f32 %v991, %v981
      %v994 = vmul.f32 %v992, %v982
      %v995 = vpack.c.bf16 %v993, %v993
      %v996 = vpack.c.bf16 %v994, %v994
      %v997 = vunpack.c.l.bf16 %v995
      %v998 = vunpack.c.l.bf16 %v996
      %v999 = vmul.f32 %v997, 0.044677734
      %v1000 = vmul.f32 %v998, 0.044677734
      %v1001 = vpack.c.bf16 %v999, %v999
      %v1002 = vpack.c.bf16 %v1000, %v1000
      %v1003 = vunpack.c.l.bf16 %v1001
      %v1004 = vunpack.c.l.bf16 %v1002
      %v1005 = vadd.f32 %v981, %v1003
      %v1006 = vadd.f32 %v982, %v1004
      %v1007 = vpack.c.bf16 %v1005, %v1005
      %v1008 = vpack.c.bf16 %v1006, %v1006
      %v1009 = vunpack.c.l.bf16 %v1007
      %v1010 = vunpack.c.l.bf16 %v1008
      %v1011 = vmul.f32 %v1009, 0.796875
      %v1012 = vmul.f32 %v1010, 0.796875
      %v1013 = vpack.c.bf16 %v1011, %v1011
      %v1014 = vpack.c.bf16 %v1012, %v1012
      %v1015 = vunpack.c.l.bf16 %v1013
      %v1016 = vunpack.c.l.bf16 %v1014
      %v1017 = vtanh.pop %v1015
      %v1018 = vtanh.pop %v1016
      %v1019 = vpack.c.bf16 %v1017, %v1017
      %v1020 = vpack.c.bf16 %v1018, %v1018
      %v1021 = vunpack.c.l.bf16 %v1019
      %v1022 = vunpack.c.l.bf16 %v1020
      %v1023 = vadd.f32 %v1021, 1.0
      %v1024 = vadd.f32 %v1022, 1.0
      %v1025 = vpack.c.bf16 %v1023, %v1023
      %v1026 = vpack.c.bf16 %v1024, %v1024
      %v1027 = vunpack.c.l.bf16 %v985
      %v1028 = vunpack.c.l.bf16 %v986
      %v1029 = vunpack.c.l.bf16 %v1025
      %v1030 = vunpack.c.l.bf16 %v1026
      %v1031 = vmul.f32 %v1027, %v1029
      %v1032 = vmul.f32 %v1028, %v1030
      %v1033 = vpack.c.bf16 %v1032, %v1031
      %v1034 = vld [vmem:[%s544] sm:$0xf]
      %v1035 = vld [vmem:[%s544 + $0x4] sm:$0xf]
      %v1036 = vld [vmem:[%s544 + $0x8] sm:$0xf]
      %v1037 = vld [vmem:[%s544 + $0xc] sm:$0xf]
      %v1038 = vld [vmem:[%s544 + $0x10] sm:$0xf]
      %v1039 = vld [vmem:[%s544 + $0x14] sm:$0xf]
      %v1040 = vld [vmem:[%s544 + $0x18] sm:$0xf]
      %v1041 = vld [vmem:[%s544 + $0x1c] sm:$0xf]
      %v1042 = vld [vmem:[%s544 + $0x20] sm:$0xf]
      %v1043 = vld [vmem:[%s544 + $0x24] sm:$0xf]
      %v1044 = vld [vmem:[%s544 + $0x28] sm:$0xf]
      %v1045 = vld [vmem:[%s544 + $0x2c] sm:$0xf]
      %v1046 = vld [vmem:[%s544 + $0x30] sm:$0xf]
      %v1047 = vld [vmem:[%s544 + $0x34] sm:$0xf]
      %v1048 = vld [vmem:[%s544 + $0x38] sm:$0xf]
      %v1049 = vld [vmem:[%s544 + $0x3c] sm:$0xf]
      %v1050 = vld [vmem:[%s547] sm:$0x1]
      %v1052 = vperm.slane %v1050, 0
      %v1070 = vunpack.c.l.b16 %v1034
      %v1071 = vunpack.c.l.b16 %v1035
      %v1072 = vunpack.c.l.b16 %v1036
      %v1073 = vunpack.c.l.b16 %v1037
      %v1074 = vunpack.c.l.b16 %v1038
      %v1075 = vunpack.c.l.b16 %v1039
      %v1076 = vunpack.c.l.b16 %v1040
      %v1077 = vunpack.c.l.b16 %v1041
      %v1078 = vunpack.c.l.b16 %v1042
      %v1079 = vunpack.c.l.b16 %v1043
      %v1080 = vunpack.c.l.b16 %v1044
      %v1081 = vunpack.c.l.b16 %v1045
      %v1082 = vunpack.c.l.b16 %v1046
      %v1083 = vunpack.c.l.b16 %v1047
      %v1084 = vunpack.c.l.b16 %v1048
      %v1085 = vunpack.c.l.b16 %v1049
      %v1086 = vpack.c.b16 %v1071, %v1070
      %v1087 = vpack.c.b16 %v1073, %v1072
      %v1088 = vpack.c.b16 %v1075, %v1074
      %v1089 = vpack.c.b16 %v1077, %v1076
      %v1090 = vpack.c.b16 %v1079, %v1078
      %v1091 = vpack.c.b16 %v1081, %v1080
      %v1092 = vpack.c.b16 %v1083, %v1082
      %v1093 = vpack.c.b16 %v1085, %v1084
      %1102 = vmatpush.bf16.msra.mxu0 %v1093
      %1103 = vmatpush.bf16.msra.mxu0 %v1092
      %1104 = vmatpush.bf16.msra.mxu0 %v1091
      %1105 = vmatpush.bf16.msra.mxu0 %v1090
      %1106 = vmatpush.bf16.msra.mxu0 %v1089
      %1107 = vmatpush.bf16.msra.mxu0 %v1088
      %1108 = vmatpush.bf16.msra.mxu0 %v1087
      %1109 = vmatpush.bf16.msra.mxu0 %v1086
      %1110 = vmatmul.bf16.gmra.mxu0 %v1033
      %v1111 = vpop.f32.mrf.mxu0
      %v1112 = vadd.f32 %v1052, %v1111
      %v1113 = vpop.f32.mrf.mxu0
      %v1114 = vadd.f32 %v1052, %v1113
      %1115 = vdwg.mxu0
      %v1116 = vadd.f32 %v745, %v1112
      %v1117 = vadd.f32 %v746, %v1114
      %1118 = vmatpush.msra.mxu0 %v762
      %1119 = vmatpush.msra.mxu0 %v761
      %1120 = vmatpush.msra.mxu0 %v760
      %1121 = vmatpush.msra.mxu0 %v759
      %1122 = vmatpush.msra.mxu0 %v758
      %1123 = vmatpush.msra.mxu0 %v757
      %1124 = vmatpush.msra.mxu0 %v756
      %1125 = vmatpush.msra.mxu0 %v755
      %1126 = vmatpush.msra.mxu0 %v754
      %1127 = vmatpush.msra.mxu0 %v753
      %1128 = vmatpush.msra.mxu0 %v752
      %1129 = vmatpush.msra.mxu0 %v751
      %1130 = vmatpush.msra.mxu0 %v750
      %1131 = vmatpush.msra.mxu0 %v749
      %1132 = vmatpush.msra.mxu0 %v748
      %1133 = vmatpush.msra.mxu0 %v747
      %1134 = vmatmul.f32.gmra.mxu0 %v1116
      %v1135 = vpop.f32.mrf.mxu0
      %v1136 = vadd.f32 0.0, %v1135
      %1137 = vmatmul.f32.gmra.mxu0 %v1117
      %v1138 = vpop.f32.mrf.mxu0
      %v1139 = vadd.f32 0.0, %v1138
      %1140 = vdwg.mxu0
      %v1142 = vsel %vm788, %v1136, 0
      %v1145 = vsel %vm788, %v1139, 0
      %1147 = vmatpush.msra.mxu0 0.0
      %1148 = vmatpush.msra.mxu0 0.0
      %1149 = vmatpush.msra.mxu0 0.0
      %1150 = vmatpush.msra.mxu0 0.0
      %1151 = vmatpush.msra.mxu0 0.0
      %1152 = vmatpush.msra.mxu0 0.0
      %1153 = vmatpush.msra.mxu0 0.0
      %1154 = vmatpush.msra.mxu0 0.0
      %1155 = vmatpush.msra.mxu0 0.0
      %1156 = vmatpush.msra.mxu0 0.0
      %1157 = vmatpush.msra.mxu0 0.0
      %1158 = vmatpush.msra.mxu0 0.0
      %1159 = vmatpush.msra.mxu0 0.0
      %1160 = vmatpush.msra.mxu0 0.0
      %1161 = vmatpush.msra.mxu0 %v764
      %1162 = vmatpush.msra.mxu0 %v763
      %1163 = vmatmul.f32.gmra.mxu0 %v1142
      %v1164 = vpop.f32.mrf.mxu0
      %v1165 = vadd.f32 0.0, %v1164
      %1166 = vmatmul.f32.gmra.mxu0 %v1145
      %v1167 = vpop.f32.mrf.mxu0
      %v1168 = vadd.f32 0.0, %v1167
      %1169 = vdwg.mxu0
      %v1170 = vsub.f32 %v1116, %v1165
      %v1171 = vsub.f32 %v1117, %v1168
      %v1172 = vmul.f32 %v1170, %v1170
      %v1173 = vmul.f32 %v1171, %v1171
      %1174 = vmatpush.msra.mxu0 %v762
      %1175 = vmatpush.msra.mxu0 %v761
      %1176 = vmatpush.msra.mxu0 %v760
      %1177 = vmatpush.msra.mxu0 %v759
      %1178 = vmatpush.msra.mxu0 %v758
      %1179 = vmatpush.msra.mxu0 %v757
      %1180 = vmatpush.msra.mxu0 %v756
      %1181 = vmatpush.msra.mxu0 %v755
      %1182 = vmatpush.msra.mxu0 %v754
      %1183 = vmatpush.msra.mxu0 %v753
      %1184 = vmatpush.msra.mxu0 %v752
      %1185 = vmatpush.msra.mxu0 %v751
      %1186 = vmatpush.msra.mxu0 %v750
      %1187 = vmatpush.msra.mxu0 %v749
      %1188 = vmatpush.msra.mxu0 %v748
      %1189 = vmatpush.msra.mxu0 %v747
      %1190 = vmatmul.f32.gmra.mxu0 %v1172
      %v1191 = vpop.f32.mrf.mxu0
      %v1192 = vadd.f32 1e-05, %v1191
      %1193 = vmatmul.f32.gmra.mxu0 %v1173
      %v1194 = vpop.f32.mrf.mxu0
      %v1195 = vadd.f32 1e-05, %v1194
      %1196 = vdwg.mxu0
      %v1197 = vrsqrt.pop %v1192
      %v1198 = vmul.f32 %v1197, %v1192
      %v1199 = vmul.f32 %v1198, %v1197
      %v1200 = vmul.f32 0.5, %v1199
      %v1201 = vsub.f32 1.5, %v1200
      %v1202 = vmul.f32 %v1197, %v1201
      %vm1203 = vweird.f32 %v1192
      %vm1204 = vweird.f32 %v1197
      %vm1205 = vmor %vm1203, %vm1204
      %v1206 = vsel %vm1205, %v1197, %v1202
      %v1207 = vrsqrt.pop %v1195
      %v1208 = vmul.f32 %v1207, %v1195
      %v1209 = vmul.f32 %v1208, %v1207
      %v1210 = vmul.f32 0.5, %v1209
      %v1211 = vsub.f32 1.5, %v1210
      %v1212 = vmul.f32 %v1207, %v1211
      %vm1213 = vweird.f32 %v1195
      %vm1214 = vweird.f32 %v1207
      %vm1215 = vmor %vm1213, %vm1214
      %v1216 = vsel %vm1215, %v1207, %v1212
      %v1218 = vsel %vm788, %v1206, 0
      %v1221 = vsel %vm788, %v1216, 0
      %1223 = vmatpush.msra.mxu0 0.0
      %1224 = vmatpush.msra.mxu0 0.0
      %1225 = vmatpush.msra.mxu0 0.0
      %1226 = vmatpush.msra.mxu0 0.0
      %1227 = vmatpush.msra.mxu0 0.0
      %1228 = vmatpush.msra.mxu0 0.0
      %1229 = vmatpush.msra.mxu0 0.0
      %1230 = vmatpush.msra.mxu0 0.0
      %1231 = vmatpush.msra.mxu0 0.0
      %1232 = vmatpush.msra.mxu0 0.0
      %1233 = vmatpush.msra.mxu0 0.0
      %1234 = vmatpush.msra.mxu0 0.0
      %1235 = vmatpush.msra.mxu0 0.0
      %1236 = vmatpush.msra.mxu0 0.0
      %1237 = vmatpush.msra.mxu0 %v764
      %1238 = vmatpush.msra.mxu0 %v763
      %1239 = vmatmul.f32.gmra.mxu0 %v1218
      %v1240 = vpop.f32.mrf.mxu0
      %v1241 = vadd.f32 0.0, %v1240
      %1242 = vmatmul.f32.gmra.mxu0 %v1221
      %v1243 = vpop.f32.mrf.mxu0
      %v1244 = vadd.f32 0.0, %v1243
      %1245 = vdwg.mxu0
      %v1246 = vmul.f32 %v1170, %v1241
      %v1247 = vmul.f32 %v1171, %v1244
      %v1248 = vpack.c.bf16 %v1247, %v1246
      %v1249 = vld [vmem:[%s552] sm:$0xff]
      %v1250 = vld [vmem:[%s552 + $0x8] sm:$0xff]
      %v1251 = vld [vmem:[%s552 + $0x10] sm:$0xff]
      %v1252 = vld [vmem:[%s552 + $0x18] sm:$0xff]
      %v1253 = vld [vmem:[%s552 + $0x20] sm:$0xff]
      %v1254 = vld [vmem:[%s552 + $0x28] sm:$0xff]
      %v1255 = vld [vmem:[%s552 + $0x30] sm:$0xff]
      %v1256 = vld [vmem:[%s552 + $0x38] sm:$0xff]
      %v1257 = vld [vmem:[%s552 + $0x40] sm:$0xff]
      %v1258 = vld [vmem:[%s552 + $0x48] sm:$0xff]
      %v1259 = vld [vmem:[%s552 + $0x50] sm:$0xff]
      %v1260 = vld [vmem:[%s552 + $0x58] sm:$0xff]
      %v1261 = vld [vmem:[%s552 + $0x60] sm:$0xff]
      %v1262 = vld [vmem:[%s552 + $0x68] sm:$0xff]
      %v1263 = vld [vmem:[%s552 + $0x70] sm:$0xff]
      %v1264 = vld [vmem:[%s552 + $0x78] sm:$0xff]
      %v1265 = vld [vmem:[%s552 + $0x80] sm:$0xff]
      %v1266 = vld [vmem:[%s552 + $0x88] sm:$0xff]
      %v1267 = vld [vmem:[%s552 + $0x90] sm:$0xff]
      %v1268 = vld [vmem:[%s552 + $0x98] sm:$0xff]
      %v1269 = vld [vmem:[%s552 + $0xa0] sm:$0xff]
      %v1270 = vld [vmem:[%s552 + $0xa8] sm:$0xff]
      %v1271 = vld [vmem:[%s552 + $0xb0] sm:$0xff]
      %v1272 = vld [vmem:[%s552 + $0xb8] sm:$0xff]
      %v1273 = vld [vmem:[%s552 + $0xc0] sm:$0xff]
      %v1274 = vld [vmem:[%s552 + $0xc8] sm:$0xff]
      %v1275 = vld [vmem:[%s552 + $0xd0] sm:$0xff]
      %v1276 = vld [vmem:[%s552 + $0xd8] sm:$0xff]
      %v1277 = vld [vmem:[%s552 + $0xe0] sm:$0xff]
      %v1278 = vld [vmem:[%s552 + $0xe8] sm:$0xff]
      %v1279 = vld [vmem:[%s552 + $0xf0] sm:$0xff]
      %v1280 = vld [vmem:[%s552 + $0xf8] sm:$0xff]
      %v1281 = vld [vmem:[%s556] sm:$0xf]
      %v1283 = vperm.slane %v1281, 0
      %v1284 = vperm.slane %v1281, 1
      %v1285 = vperm.slane %v1281, 2
      %v1286 = vperm.slane %v1281, 3
      %v1323 = vunpack.c.l.b16 %v1249
      %v1324 = vunpack.c.h.b16 %v1249
      %v1325 = vunpack.c.l.b16 %v1250
      %v1326 = vunpack.c.h.b16 %v1250
      %v1327 = vunpack.c.l.b16 %v1251
      %v1328 = vunpack.c.h.b16 %v1251
      %v1329 = vunpack.c.l.b16 %v1252
      %v1330 = vunpack.c.h.b16 %v1252
      %v1331 = vunpack.c.l.b16 %v1253
      %v1332 = vunpack.c.h.b16 %v1253
      %v1333 = vunpack.c.l.b16 %v1254
      %v1334 = vunpack.c.h.b16 %v1254
      %v1335 = vunpack.c.l.b16 %v1255
      %v1336 = vunpack.c.h.b16 %v1255
      %v1337 = vunpack.c.l.b16 %v1256
      %v1338 = vunpack.c.h.b16 %v1256
      %v1339 = vunpack.c.l.b16 %v1257
      %v1340 = vunpack.c.h.b16 %v1257
      %v1341 = vunpack.c.l.b16 %v1258
      %v1342 = vunpack.c.h.b16 %v1258
      %v1343 = vunpack.c.l.b16 %v1259
      %v1344 = vunpack.c.h.b16 %v1259
      %v1345 = vunpack.c.l.b16 %v1260
      %v1346 = vunpack.c.h.b16 %v1260
      %v1347 = vunpack.c.l.b16 %v1261
      %v1348 = vunpack.c.h.b16 %v1261
      %v1349 = vunpack.c.l.b16 %v1262
      %v1350 = vunpack.c.h.b16 %v1262
      %v1351 = vunpack.c.l.b16 %v1263
      %v1352 = vunpack.c.h.b16 %v1263
      %v1353 = vunpack.c.l.b16 %v1264
      %v1354 = vunpack.c.h.b16 %v1264
      %v1355 = vunpack.c.l.b16 %v1265
      %v1356 = vunpack.c.h.b16 %v1265
      %v1357 = vunpack.c.l.b16 %v1266
      %v1358 = vunpack.c.h.b16 %v1266
      %v1359 = vunpack.c.l.b16 %v1267
      %v1360 = vunpack.c.h.b16 %v1267
      %v1361 = vunpack.c.l.b16 %v1268
      %v1362 = vunpack.c.h.b16 %v1268
      %v1363 = vunpack.c.l.b16 %v1269
      %v1364 = vunpack.c.h.b16 %v1269
      %v1365 = vunpack.c.l.b16 %v1270
      %v1366 = vunpack.c.h.b16 %v1270
      %v1367 = vunpack.c.l.b16 %v1271
      %v1368 = vunpack.c.h.b16 %v1271
      %v1369 = vunpack.c.l.b16 %v1272
      %v1370 = vunpack.c.h.b16 %v1272
      %v1371 = vunpack.c.l.b16 %v1273
      %v1372 = vunpack.c.h.b16 %v1273
      %v1373 = vunpack.c.l.b16 %v1274
      %v1374 = vunpack.c.h.b16 %v1274
      %v1375 = vunpack.c.l.b16 %v1275
      %v1376 = vunpack.c.h.b16 %v1275
      %v1377 = vunpack.c.l.b16 %v1276
      %v1378 = vunpack.c.h.b16 %v1276
      %v1379 = vunpack.c.l.b16 %v1277
      %v1380 = vunpack.c.h.b16 %v1277
      %v1381 = vunpack.c.l.b16 %v1278
      %v1382 = vunpack.c.h.b16 %v1278
      %v1383 = vunpack.c.l.b16 %v1279
      %v1384 = vunpack.c.h.b16 %v1279
      %v1385 = vunpack.c.l.b16 %v1280
      %v1386 = vunpack.c.h.b16 %v1280
      %v1387 = vpack.c.b16 %v1327, %v1323
      %v1388 = vpack.c.b16 %v1328, %v1324
      %v1389 = vpack.c.b16 %v1329, %v1325
      %v1390 = vpack.c.b16 %v1330, %v1326
      %v1391 = vpack.c.b16 %v1335, %v1331
      %v1392 = vpack.c.b16 %v1336, %v1332
      %v1393 = vpack.c.b16 %v1337, %v1333
      %v1394 = vpack.c.b16 %v1338, %v1334
      %v1395 = vpack.c.b16 %v1343, %v1339
      %v1396 = vpack.c.b16 %v1344, %v1340
      %v1397 = vpack.c.b16 %v1345, %v1341
      %v1398 = vpack.c.b16 %v1346, %v1342
      %v1399 = vpack.c.b16 %v1351, %v1347
      %v1400 = vpack.c.b16 %v1352, %v1348
      %v1401 = vpack.c.b16 %v1353, %v1349
      %v1402 = vpack.c.b16 %v1354, %v1350
      %v1403 = vpack.c.b16 %v1359, %v1355
      %v1404 = vpack.c.b16 %v1360, %v1356
      %v1405 = vpack.c.b16 %v1361, %v1357
      %v1406 = vpack.c.b16 %v1362, %v1358
      %v1407 = vpack.c.b16 %v1367, %v1363
      %v1408 = vpack.c.b16 %v1368, %v1364
      %v1409 = vpack.c.b16 %v1369, %v1365
      %v1410 = vpack.c.b16 %v1370, %v1366
      %v1411 = vpack.c.b16 %v1375, %v1371
      %v1412 = vpack.c.b16 %v1376, %v1372
      %v1413 = vpack.c.b16 %v1377, %v1373
      %v1414 = vpack.c.b16 %v1378, %v1374
      %v1415 = vpack.c.b16 %v1383, %v1379
      %v1416 = vpack.c.b16 %v1384, %v1380
      %v1417 = vpack.c.b16 %v1385, %v1381
      %v1418 = vpack.c.b16 %v1386, %v1382
      %1451 = vmatpush.bf16.msra.mxu0 %v1415
      %1452 = vmatpush.bf16.msra.mxu0 %v1411
      %1453 = vmatpush.bf16.msra.mxu0 %v1407
      %1454 = vmatpush.bf16.msra.mxu0 %v1403
      %1455 = vmatpush.bf16.msra.mxu0 %v1399
      %1456 = vmatpush.bf16.msra.mxu0 %v1395
      %1457 = vmatpush.bf16.msra.mxu0 %v1391
      %1458 = vmatpush.bf16.msra.mxu0 %v1387
      %1459 = vmatmul.bf16.gmra.mxu0 %v1248
      %v1460 = vpop.f32.mrf.mxu0
      %v1461 = vadd.f32 %v1283, %v1460
      %v1462 = vpop.f32.mrf.mxu0
      %v1463 = vadd.f32 %v1283, %v1462
      %1464 = vdwg.mxu0
      %1465 = vmatpush.bf16.msra.mxu0 %v1416
      %1466 = vmatpush.bf16.msra.mxu0 %v1412
      %1467 = vmatpush.bf16.msra.mxu0 %v1408
      %1468 = vmatpush.bf16.msra.mxu0 %v1404
      %1469 = vmatpush.bf16.msra.mxu0 %v1400
      %1470 = vmatpush.bf16.msra.mxu0 %v1396
      %1471 = vmatpush.bf16.msra.mxu0 %v1392
      %1472 = vmatpush.bf16.msra.mxu0 %v1388
      %1473 = vmatmul.bf16.gmra.mxu0 %v1248
      %v1474 = vpop.f32.mrf.mxu0
      %v1475 = vadd.f32 %v1284, %v1474
      %v1476 = vpop.f32.mrf.mxu0
      %v1477 = vadd.f32 %v1284, %v1476
      %1478 = vdwg.mxu0
      %1479 = vmatpush.bf16.msra.mxu0 %v1417
      %1480 = vmatpush.bf16.msra.mxu0 %v1413
      %1481 = vmatpush.bf16.msra.mxu0 %v1409
      %1482 = vmatpush.bf16.msra.mxu0 %v1405
      %1483 = vmatpush.bf16.msra.mxu0 %v1401
      %1484 = vmatpush.bf16.msra.mxu0 %v1397
      %1485 = vmatpush.bf16.msra.mxu0 %v1393
      %1486 = vmatpush.bf16.msra.mxu0 %v1389
      %1487 = vmatmul.bf16.gmra.mxu0 %v1248
      %v1488 = vpop.f32.mrf.mxu0
      %v1489 = vadd.f32 %v1285, %v1488
      %v1490 = vpop.f32.mrf.mxu0
      %v1491 = vadd.f32 %v1285, %v1490
      %1492 = vdwg.mxu0
      %1493 = vmatpush.bf16.msra.mxu0 %v1418
      %1494 = vmatpush.bf16.msra.mxu0 %v1414
      %1495 = vmatpush.bf16.msra.mxu0 %v1410
      %1496 = vmatpush.bf16.msra.mxu0 %v1406
      %1497 = vmatpush.bf16.msra.mxu0 %v1402
      %1498 = vmatpush.bf16.msra.mxu0 %v1398
      %1499 = vmatpush.bf16.msra.mxu0 %v1394
      %1500 = vmatpush.bf16.msra.mxu0 %v1390
      %1501 = vmatmul.bf16.gmra.mxu0 %v1248
      %v1502 = vpop.f32.mrf.mxu0
      %v1503 = vadd.f32 %v1286, %v1502
      %v1504 = vpop.f32.mrf.mxu0
      %v1505 = vadd.f32 %v1286, %v1504
      %1506 = vdwg.mxu0
      %v1507 = vpack.c.bf16 %v1475, %v1461
      %v1508 = vpack.c.bf16 %v1503, %v1489
      %v1509 = vpack.c.bf16 %v1477, %v1463
      %v1510 = vpack.c.bf16 %v1505, %v1491
      %v1511 = vunpack.c.l.bf16 %v1507
      %v1512 = vunpack.c.h.bf16 %v1507
      %v1513 = vunpack.c.l.bf16 %v1508
      %v1514 = vunpack.c.h.bf16 %v1508
      %v1515 = vunpack.c.l.bf16 %v1509
      %v1516 = vunpack.c.h.bf16 %v1509
      %v1517 = vunpack.c.l.bf16 %v1510
      %v1518 = vunpack.c.h.bf16 %v1510
      %v1519 = vmul.f32 %v1511, 0.5
      %v1520 = vmul.f32 %v1512, 0.5
      %v1521 = vmul.f32 %v1513, 0.5
      %v1522 = vmul.f32 %v1514, 0.5
      %v1523 = vmul.f32 %v1515, 0.5
      %v1524 = vmul.f32 %v1516, 0.5
      %v1525 = vmul.f32 %v1517, 0.5
      %v1526 = vmul.f32 %v1518, 0.5
      %v1527 = vpack.c.bf16 %v1520, %v1519
      %v1528 = vpack.c.bf16 %v1522, %v1521
      %v1529 = vpack.c.bf16 %v1524, %v1523
      %v1530 = vpack.c.bf16 %v1526, %v1525
      %v1531 = vmul.f32 %v1511, %v1511
      %v1532 = vmul.f32 %v1512, %v1512
      %v1533 = vmul.f32 %v1513, %v1513
      %v1534 = vmul.f32 %v1514, %v1514
      %v1535 = vmul.f32 %v1515, %v1515
      %v1536 = vmul.f32 %v1516, %v1516
      %v1537 = vmul.f32 %v1517, %v1517
      %v1538 = vmul.f32 %v1518, %v1518
      %v1539 = vpack.c.bf16 %v1532, %v1531
      %v1540 = vpack.c.bf16 %v1534, %v1533
      %v1541 = vpack.c.bf16 %v1536, %v1535
      %v1542 = vpack.c.bf16 %v1538, %v1537
      %v1543 = vunpack.c.l.bf16 %v1539
      %v1544 = vunpack.c.h.bf16 %v1539
      %v1545 = vunpack.c.l.bf16 %v1540
      %v1546 = vunpack.c.h.bf16 %v1540
      %v1547 = vunpack.c.l.bf16 %v1541
      %v1548 = vunpack.c.h.bf16 %v1541
      %v1549 = vunpack.c.l.bf16 %v1542
      %v1550 = vunpack.c.h.bf16 %v1542
      %v1551 = vmul.f32 %v1543, %v1511
      %v1552 = vmul.f32 %v1544, %v1512
      %v1553 = vmul.f32 %v1545, %v1513
      %v1554 = vmul.f32 %v1546, %v1514
      %v1555 = vmul.f32 %v1547, %v1515
      %v1556 = vmul.f32 %v1548, %v1516
      %v1557 = vmul.f32 %v1549, %v1517
      %v1558 = vmul.f32 %v1550, %v1518
      %v1559 = vpack.c.bf16 %v1552, %v1551
      %v1560 = vpack.c.bf16 %v1554, %v1553
      %v1561 = vpack.c.bf16 %v1556, %v1555
      %v1562 = vpack.c.bf16 %v1558, %v1557
      %v1563 = vunpack.c.l.bf16 %v1559
      %v1564 = vunpack.c.h.bf16 %v1559
      %v1565 = vunpack.c.l.bf16 %v1560
      %v1566 = vunpack.c.h.bf16 %v1560
      %v1567 = vunpack.c.l.bf16 %v1561
      %v1568 = vunpack.c.h.bf16 %v1561
      %v1569 = vunpack.c.l.bf16 %v1562
      %v1570 = vunpack.c.h.bf16 %v1562
      %v1571 = vmul.f32 %v1563, 0.044677734
      %v1572 = vmul.f32 %v1564, 0.044677734
      %v1573 = vmul.f32 %v1565, 0.044677734
      %v1574 = vmul.f32 %v1566, 0.044677734
      %v1575 = vmul.f32 %v1567, 0.044677734
      %v1576 = vmul.f32 %v1568, 0.044677734
      %v1577 = vmul.f32 %v1569, 0.044677734
      %v1578 = vmul.f32 %v1570, 0.044677734
      %v1579 = vpack.c.bf16 %v1572, %v1571
      %v1580 = vpack.c.bf16 %v1574, %v1573
      %v1581 = vpack.c.bf16 %v1576, %v1575
      %v1582 = vpack.c.bf16 %v1578, %v1577
      %v1583 = vunpack.c.l.bf16 %v1579
      %v1584 = vunpack.c.h.bf16 %v1579
      %v1585 = vunpack.c.l.bf16 %v1580
      %v1586 = vunpack.c.h.bf16 %v1580
      %v1587 = vunpack.c.l.bf16 %v1581
      %v1588 = vunpack.c.h.bf16 %v1581
      %v1589 = vunpack.c.l.bf16 %v1582
      %v1590 = vunpack.c.h.bf16 %v1582
      %v1591 = vadd.f32 %v1511, %v1583
      %v1592 = vadd.f32 %v1512, %v1584
      %v1593 = vadd.f32 %v1513, %v1585
      %v1594 = vadd.f32 %v1514, %v1586
      %v1595 = vadd.f32 %v1515, %v1587
      %v1596 = vadd.f32 %v1516, %v1588
      %v1597 = vadd.f32 %v1517, %v1589
      %v1598 = vadd.f32 %v1518, %v1590
      %v1599 = vpack.c.bf16 %v1592, %v1591
      %v1600 = vpack.c.bf16 %v1594, %v1593
      %v1601 = vpack.c.bf16 %v1596, %v1595
      %v1602 = vpack.c.bf16 %v1598, %v1597
      %v1603 = vunpack.c.l.bf16 %v1599
      %v1604 = vunpack.c.h.bf16 %v1599
      %v1605 = vunpack.c.l.bf16 %v1600
      %v1606 = vunpack.c.h.bf16 %v1600
      %v1607 = vunpack.c.l.bf16 %v1601
      %v1608 = vunpack.c.h.bf16 %v1601
      %v1609 = vunpack.c.l.bf16 %v1602
      %v1610 = vunpack.c.h.bf16 %v1602
      %v1611 = vmul.f32 %v1603, 0.796875
      %v1612 = vmul.f32 %v1604, 0.796875
      %v1613 = vmul.f32 %v1605, 0.796875
      %v1614 = vmul.f32 %v1606, 0.796875
      %v1615 = vmul.f32 %v1607, 0.796875
      %v1616 = vmul.f32 %v1608, 0.796875
      %v1617 = vmul.f32 %v1609, 0.796875
      %v1618 = vmul.f32 %v1610, 0.796875
      %v1619 = vpack.c.bf16 %v1612, %v1611
      %v1620 = vpack.c.bf16 %v1614, %v1613
      %v1621 = vpack.c.bf16 %v1616, %v1615
      %v1622 = vpack.c.bf16 %v1618, %v1617
      %v1623 = vunpack.c.l.bf16 %v1619
      %v1624 = vunpack.c.h.bf16 %v1619
      %v1625 = vunpack.c.l.bf16 %v1620
      %v1626 = vunpack.c.h.bf16 %v1620
      %v1627 = vunpack.c.l.bf16 %v1621
      %v1628 = vunpack.c.h.bf16 %v1621
      %v1629 = vunpack.c.l.bf16 %v1622
      %v1630 = vunpack.c.h.bf16 %v1622
      %v1631 = vtanh.pop %v1623
      %v1632 = vtanh.pop %v1624
      %v1633 = vtanh.pop %v1625
      %v1634 = vtanh.pop %v1626
      %v1635 = vtanh.pop %v1627
      %v1636 = vtanh.pop %v1628
      %v1637 = vtanh.pop %v1629
      %v1638 = vtanh.pop %v1630
      %v1639 = vpack.c.bf16 %v1632, %v1631
      %v1640 = vpack.c.bf16 %v1634, %v1633
      %v1641 = vpack.c.bf16 %v1636, %v1635
      %v1642 = vpack.c.bf16 %v1638, %v1637
      %v1643 = vunpack.c.l.bf16 %v1639
      %v1644 = vunpack.c.h.bf16 %v1639
      %v1645 = vunpack.c.l.bf16 %v1640
      %v1646 = vunpack.c.h.bf16 %v1640
      %v1647 = vunpack.c.l.bf16 %v1641
      %v1648 = vunpack.c.h.bf16 %v1641
      %v1649 = vunpack.c.l.bf16 %v1642
      %v1650 = vunpack.c.h.bf16 %v1642
      %v1651 = vadd.f32 %v1643, 1.0
      %v1652 = vadd.f32 %v1644, 1.0
      %v1653 = vadd.f32 %v1645, 1.0
      %v1654 = vadd.f32 %v1646, 1.0
      %v1655 = vadd.f32 %v1647, 1.0
      %v1656 = vadd.f32 %v1648, 1.0
      %v1657 = vadd.f32 %v1649, 1.0
      %v1658 = vadd.f32 %v1650, 1.0
      %v1659 = vpack.c.bf16 %v1652, %v1651
      %v1660 = vpack.c.bf16 %v1654, %v1653
      %v1661 = vpack.c.bf16 %v1656, %v1655
      %v1662 = vpack.c.bf16 %v1658, %v1657
      %v1663 = vunpack.c.l.bf16 %v1527
      %v1664 = vunpack.c.h.bf16 %v1527
      %v1665 = vunpack.c.l.bf16 %v1528
      %v1666 = vunpack.c.h.bf16 %v1528
      %v1667 = vunpack.c.l.bf16 %v1529
      %v1668 = vunpack.c.h.bf16 %v1529
      %v1669 = vunpack.c.l.bf16 %v1530
      %v1670 = vunpack.c.h.bf16 %v1530
      %v1671 = vunpack.c.l.bf16 %v1659
      %v1672 = vunpack.c.h.bf16 %v1659
      %v1673 = vunpack.c.l.bf16 %v1660
      %v1674 = vunpack.c.h.bf16 %v1660
      %v1675 = vunpack.c.l.bf16 %v1661
      %v1676 = vunpack.c.h.bf16 %v1661
      %v1677 = vunpack.c.l.bf16 %v1662
      %v1678 = vunpack.c.h.bf16 %v1662
      %v1679 = vmul.f32 %v1663, %v1671
      %v1680 = vmul.f32 %v1664, %v1672
      %v1681 = vmul.f32 %v1665, %v1673
      %v1682 = vmul.f32 %v1666, %v1674
      %v1683 = vmul.f32 %v1667, %v1675
      %v1684 = vmul.f32 %v1668, %v1676
      %v1685 = vmul.f32 %v1669, %v1677
      %v1686 = vmul.f32 %v1670, %v1678
      %v1687 = vpack.c.bf16 %v1683, %v1679
      %v1688 = vpack.c.bf16 %v1684, %v1680
      %v1689 = vpack.c.bf16 %v1685, %v1681
      %v1690 = vpack.c.bf16 %v1686, %v1682
      %v1691 = vld [vmem:[%s561] sm:$0xf]
      %v1692 = vld [vmem:[%s561 + $0x4] sm:$0xf]
      %v1693 = vld [vmem:[%s561 + $0x8] sm:$0xf]
      %v1694 = vld [vmem:[%s561 + $0xc] sm:$0xf]
      %v1695 = vld [vmem:[%s561 + $0x10] sm:$0xf]
      %v1696 = vld [vmem:[%s561 + $0x14] sm:$0xf]
      %v1697 = vld [vmem:[%s561 + $0x18] sm:$0xf]
      %v1698 = vld [vmem:[%s561 + $0x1c] sm:$0xf]
      %v1699 = vld [vmem:[%s561 + $0x20] sm:$0xf]
      %v1700 = vld [vmem:[%s561 + $0x24] sm:$0xf]
      %v1701 = vld [vmem:[%s561 + $0x28] sm:$0xf]
      %v1702 = vld [vmem:[%s561 + $0x2c] sm:$0xf]
      %v1703 = vld [vmem:[%s561 + $0x30] sm:$0xf]
      %v1704 = vld [vmem:[%s561 + $0x34] sm:$0xf]
      %v1705 = vld [vmem:[%s561 + $0x38] sm:$0xf]
      %v1706 = vld [vmem:[%s561 + $0x3c] sm:$0xf]
      %v1707 = vld [vmem:[%s561 + $0x40] sm:$0xf]
      %v1708 = vld [vmem:[%s561 + $0x44] sm:$0xf]
      %v1709 = vld [vmem:[%s561 + $0x48] sm:$0xf]
      %v1710 = vld [vmem:[%s561 + $0x4c] sm:$0xf]
      %v1711 = vld [vmem:[%s561 + $0x50] sm:$0xf]
      %v1712 = vld [vmem:[%s561 + $0x54] sm:$0xf]
      %v1713 = vld [vmem:[%s561 + $0x58] sm:$0xf]
      %v1714 = vld [vmem:[%s561 + $0x5c] sm:$0xf]
      %v1715 = vld [vmem:[%s561 + $0x60] sm:$0xf]
      %v1716 = vld [vmem:[%s561 + $0x64] sm:$0xf]
      %v1717 = vld [vmem:[%s561 + $0x68] sm:$0xf]
      %v1718 = vld [vmem:[%s561 + $0x6c] sm:$0xf]
      %v1719 = vld [vmem:[%s561 + $0x70] sm:$0xf]
      %v1720 = vld [vmem:[%s561 + $0x74] sm:$0xf]
      %v1721 = vld [vmem:[%s561 + $0x78] sm:$0xf]
      %v1722 = vld [vmem:[%s561 + $0x7c] sm:$0xf]
      %v1723 = vld [vmem:[%s561 + $0x80] sm:$0xf]
      %v1724 = vld [vmem:[%s561 + $0x84] sm:$0xf]
      %v1725 = vld [vmem:[%s561 + $0x88] sm:$0xf]
      %v1726 = vld [vmem:[%s561 + $0x8c] sm:$0xf]
      %v1727 = vld [vmem:[%s561 + $0x90] sm:$0xf]
      %v1728 = vld [vmem:[%s561 + $0x94] sm:$0xf]
      %v1729 = vld [vmem:[%s561 + $0x98] sm:$0xf]
      %v1730 = vld [vmem:[%s561 + $0x9c] sm:$0xf]
      %v1731 = vld [vmem:[%s561 + $0xa0] sm:$0xf]
      %v1732 = vld [vmem:[%s561 + $0xa4] sm:$0xf]
      %v1733 = vld [vmem:[%s561 + $0xa8] sm:$0xf]
      %v1734 = vld [vmem:[%s561 + $0xac] sm:$0xf]
      %v1735 = vld [vmem:[%s561 + $0xb0] sm:$0xf]
      %v1736 = vld [vmem:[%s561 + $0xb4] sm:$0xf]
      %v1737 = vld [vmem:[%s561 + $0xb8] sm:$0xf]
      %v1738 = vld [vmem:[%s561 + $0xbc] sm:$0xf]
      %v1739 = vld [vmem:[%s561 + $0xc0] sm:$0xf]
      %v1740 = vld [vmem:[%s561 + $0xc4] sm:$0xf]
      %v1741 = vld [vmem:[%s561 + $0xc8] sm:$0xf]
      %v1742 = vld [vmem:[%s561 + $0xcc] sm:$0xf]
      %v1743 = vld [vmem:[%s561 + $0xd0] sm:$0xf]
      %v1744 = vld [vmem:[%s561 + $0xd4] sm:$0xf]
      %v1745 = vld [vmem:[%s561 + $0xd8] sm:$0xf]
      %v1746 = vld [vmem:[%s561 + $0xdc] sm:$0xf]
      %v1747 = vld [vmem:[%s561 + $0xe0] sm:$0xf]
      %v1748 = vld [vmem:[%s561 + $0xe4] sm:$0xf]
      %v1749 = vld [vmem:[%s561 + $0xe8] sm:$0xf]
      %v1750 = vld [vmem:[%s561 + $0xec] sm:$0xf]
      %v1751 = vld [vmem:[%s561 + $0xf0] sm:$0xf]
      %v1752 = vld [vmem:[%s561 + $0xf4] sm:$0xf]
      %v1753 = vld [vmem:[%s561 + $0xf8] sm:$0xf]
      %v1754 = vld [vmem:[%s561 + $0xfc] sm:$0xf]
      %v1755 = vld [vmem:[%s564] sm:$0x1]
      %v1757 = vperm.slane %v1755, 0
      %v1823 = vunpack.c.l.b16 %v1691
      %v1824 = vunpack.c.l.b16 %v1692
      %v1825 = vunpack.c.l.b16 %v1693
      %v1826 = vunpack.c.l.b16 %v1694
      %v1827 = vunpack.c.l.b16 %v1695
      %v1828 = vunpack.c.l.b16 %v1696
      %v1829 = vunpack.c.l.b16 %v1697
      %v1830 = vunpack.c.l.b16 %v1698
      %v1831 = vunpack.c.l.b16 %v1699
      %v1832 = vunpack.c.l.b16 %v1700
      %v1833 = vunpack.c.l.b16 %v1701
      %v1834 = vunpack.c.l.b16 %v1702
      %v1835 = vunpack.c.l.b16 %v1703
      %v1836 = vunpack.c.l.b16 %v1704
      %v1837 = vunpack.c.l.b16 %v1705
      %v1838 = vunpack.c.l.b16 %v1706
      %v1839 = vunpack.c.l.b16 %v1707
      %v1840 = vunpack.c.l.b16 %v1708
      %v1841 = vunpack.c.l.b16 %v1709
      %v1842 = vunpack.c.l.b16 %v1710
      %v1843 = vunpack.c.l.b16 %v1711
      %v1844 = vunpack.c.l.b16 %v1712
      %v1845 = vunpack.c.l.b16 %v1713
      %v1846 = vunpack.c.l.b16 %v1714
      %v1847 = vunpack.c.l.b16 %v1715
      %v1848 = vunpack.c.l.b16 %v1716
      %v1849 = vunpack.c.l.b16 %v1717
      %v1850 = vunpack.c.l.b16 %v1718
      %v1851 = vunpack.c.l.b16 %v1719
      %v1852 = vunpack.c.l.b16 %v1720
      %v1853 = vunpack.c.l.b16 %v1721
      %v1854 = vunpack.c.l.b16 %v1722
      %v1855 = vunpack.c.l.b16 %v1723
      %v1856 = vunpack.c.l.b16 %v1724
      %v1857 = vunpack.c.l.b16 %v1725
      %v1858 = vunpack.c.l.b16 %v1726
      %v1859 = vunpack.c.l.b16 %v1727
      %v1860 = vunpack.c.l.b16 %v1728
      %v1861 = vunpack.c.l.b16 %v1729
      %v1862 = vunpack.c.l.b16 %v1730
      %v1863 = vunpack.c.l.b16 %v1731
      %v1864 = vunpack.c.l.b16 %v1732
      %v1865 = vunpack.c.l.b16 %v1733
      %v1866 = vunpack.c.l.b16 %v1734
      %v1867 = vunpack.c.l.b16 %v1735
      %v1868 = vunpack.c.l.b16 %v1736
      %v1869 = vunpack.c.l.b16 %v1737
      %v1870 = vunpack.c.l.b16 %v1738
      %v1871 = vunpack.c.l.b16 %v1739
      %v1872 = vunpack.c.l.b16 %v1740
      %v1873 = vunpack.c.l.b16 %v1741
      %v1874 = vunpack.c.l.b16 %v1742
      %v1875 = vunpack.c.l.b16 %v1743
      %v1876 = vunpack.c.l.b16 %v1744
      %v1877 = vunpack.c.l.b16 %v1745
      %v1878 = vunpack.c.l.b16 %v1746
      %v1879 = vunpack.c.l.b16 %v1747
      %v1880 = vunpack.c.l.b16 %v1748
      %v1881 = vunpack.c.l.b16 %v1749
      %v1882 = vunpack.c.l.b16 %v1750
      %v1883 = vunpack.c.l.b16 %v1751
      %v1884 = vunpack.c.l.b16 %v1752
      %v1885 = vunpack.c.l.b16 %v1753
      %v1886 = vunpack.c.l.b16 %v1754
      %v1887 = vpack.c.b16 %v1824, %v1823
      %v1888 = vpack.c.b16 %v1826, %v1825
      %v1889 = vpack.c.b16 %v1828, %v1827
      %v1890 = vpack.c.b16 %v1830, %v1829
      %v1891 = vpack.c.b16 %v1832, %v1831
      %v1892 = vpack.c.b16 %v1834, %v1833
      %v1893 = vpack.c.b16 %v1836, %v1835
      %v1894 = vpack.c.b16 %v1838, %v1837
      %v1895 = vpack.c.b16 %v1840, %v1839
      %v1896 = vpack.c.b16 %v1842, %v1841
      %v1897 = vpack.c.b16 %v1844, %v1843
      %v1898 = vpack.c.b16 %v1846, %v1845
      %v1899 = vpack.c.b16 %v1848, %v1847
      %v1900 = vpack.c.b16 %v1850, %v1849
      %v1901 = vpack.c.b16 %v1852, %v1851
      %v1902 = vpack.c.b16 %v1854, %v1853
      %v1903 = vpack.c.b16 %v1856, %v1855
      %v1904 = vpack.c.b16 %v1858, %v1857
      %v1905 = vpack.c.b16 %v1860, %v1859
      %v1906 = vpack.c.b16 %v1862, %v1861
      %v1907 = vpack.c.b16 %v1864, %v1863
      %v1908 = vpack.c.b16 %v1866, %v1865
      %v1909 = vpack.c.b16 %v1868, %v1867
      %v1910 = vpack.c.b16 %v1870, %v1869
      %v1911 = vpack.c.b16 %v1872, %v1871
      %v1912 = vpack.c.b16 %v1874, %v1873
      %v1913 = vpack.c.b16 %v1876, %v1875
      %v1914 = vpack.c.b16 %v1878, %v1877
      %v1915 = vpack.c.b16 %v1880, %v1879
      %v1916 = vpack.c.b16 %v1882, %v1881
      %v1917 = vpack.c.b16 %v1884, %v1883
      %v1918 = vpack.c.b16 %v1886, %v1885
      %1951 = vmatpush.bf16.msra.mxu0 %v1894
      %1952 = vmatpush.bf16.msra.mxu0 %v1893
      %1953 = vmatpush.bf16.msra.mxu0 %v1892
      %1954 = vmatpush.bf16.msra.mxu0 %v1891
      %1955 = vmatpush.bf16.msra.mxu0 %v1890
      %1956 = vmatpush.bf16.msra.mxu0 %v1889
      %1957 = vmatpush.bf16.msra.mxu0 %v1888
      %1958 = vmatpush.bf16.msra.mxu0 %v1887
      %1959 = vmatmul.bf16.gmra.mxu0 %v1687
      %v1960 = vpop.f32.mrf.mxu0
      %v1961 = vadd.f32 %v1757, %v1960
      %v1962 = vpop.f32.mrf.mxu0
      %v1963 = vadd.f32 %v1757, %v1962
      %1964 = vdwg.mxu0
      %1965 = vmatpush.bf16.msra.mxu0 %v1902
      %1966 = vmatpush.bf16.msra.mxu0 %v1901
      %1967 = vmatpush.bf16.msra.mxu0 %v1900
      %1968 = vmatpush.bf16.msra.mxu0 %v1899
      %1969 = vmatpush.bf16.msra.mxu0 %v1898
      %1970 = vmatpush.bf16.msra.mxu0 %v1897
      %1971 = vmatpush.bf16.msra.mxu0 %v1896
      %1972 = vmatpush.bf16.msra.mxu0 %v1895
      %1973 = vmatmul.bf16.gmra.mxu0 %v1688
      %v1974 = vpop.f32.mrf.mxu0
      %v1975 = vadd.f32 %v1961, %v1974
      %v1976 = vpop.f32.mrf.mxu0
      %v1977 = vadd.f32 %v1963, %v1976
      %1978 = vdwg.mxu0
      %1979 = vmatpush.bf16.msra.mxu0 %v1910
      %1980 = vmatpush.bf16.msra.mxu0 %v1909
      %1981 = vmatpush.bf16.msra.mxu0 %v1908
      %1982 = vmatpush.bf16.msra.mxu0 %v1907
      %1983 = vmatpush.bf16.msra.mxu0 %v1906
      %1984 = vmatpush.bf16.msra.mxu0 %v1905
      %1985 = vmatpush.bf16.msra.mxu0 %v1904
      %1986 = vmatpush.bf16.msra.mxu0 %v1903
      %1987 = vmatmul.bf16.gmra.mxu0 %v1689
      %v1988 = vpop.f32.mrf.mxu0
      %v1989 = vadd.f32 %v1975, %v1988
      %v1990 = vpop.f32.mrf.mxu0
      %v1991 = vadd.f32 %v1977, %v1990
      %1992 = vdwg.mxu0
      %1993 = vmatpush.bf16.msra.mxu0 %v1918
      %1994 = vmatpush.bf16.msra.mxu0 %v1917
      %1995 = vmatpush.bf16.msra.mxu0 %v1916
      %1996 = vmatpush.bf16.msra.mxu0 %v1915
      %1997 = vmatpush.bf16.msra.mxu0 %v1914
      %1998 = vmatpush.bf16.msra.mxu0 %v1913
      %1999 = vmatpush.bf16.msra.mxu0 %v1912
      %2000 = vmatpush.bf16.msra.mxu0 %v1911
      %2001 = vmatmul.bf16.gmra.mxu0 %v1690
      %v2002 = vpop.f32.mrf.mxu0
      %v2003 = vadd.f32 %v1989, %v2002
      %v2004 = vpop.f32.mrf.mxu0
      %v2005 = vadd.f32 %v1991, %v2004
      %2006 = vdwg.mxu0
      %v2007 = vadd.f32 %v1116, %v2003
      %v2008 = vadd.f32 %v1117, %v2005
      %2009 = vst [vmem:[%s569] sm:$0xff] %v2007
      %2010 = vst [vmem:[%s569 + $0x8] sm:$0xff] %v2008
      %s2011 = smul.u32 2, %s27
      %p2012 = scmp.lt.s32.totalorder %s2011, 3
      %s2013 = scalar_select %p2012, %s2011, 3
      %s2014 = smul.addr %s2013, 8
      %s2015 = scalar_lea.vmem %s12, %s2014
      // Predicated region
      $region73: #{decode_layer_forward.1} parent=67 // pred_check
        %p2016 = pneg %p350
      $region74: #{decode_layer_forward.1} parent=67 // pred_check_branch
        %2018 = sbr.rel (%p2016) target = $region76
      $region75: #{decode_layer_forward.1} parent=67 // pred_region
        %s2019 = smul.u32 2, %s27
      $region76: #{decode_layer_forward.1} parent=67 // pred_fallthru
        _
    $region68: #{decode_layer_forward.1} parent=5 // pred_fallthru
      _
    %p2020 = scmp.le.s32.totalorder 2, %s18
    // Predicated region
    $region77: #{decode_layer_forward.1} parent=5 // pred_check
      %p2021 = pneg %p2020
    $region78: #{decode_layer_forward.1} parent=5 // pred_check_branch
      %2023 = sbr.rel (%p2021) target = $region80
    $region79: #{decode_layer_forward.1} parent=5 // pred_region
      %s2024 = ssub.s32 %s18, 2
      // Predicated region
      $region81: #{decode_layer_forward.1} parent=79 // pred_check
        %p2025 = pneg %p356
      $region82: #{decode_layer_forward.1} parent=79 // pred_check_branch
        %2027 = sbr.rel (%p2025) target = $region84
      $region83: #{decode_layer_forward.1} parent=79 // pred_region
        %s2028 = smul.u32 2, %s29
        %p2029 = scmp.lt.s32.totalorder %s2028, 3
        %s2030 = scalar_select %p2029, %s2028, 3
        %s2031 = smul.addr %s2030, 8
        %s2032 = scalar_lea.vmem %s12, %s2031
      $region84: #{decode_layer_forward.1} parent=79 // pred_fallthru
        _
    $region80: #{decode_layer_forward.1} parent=5 // pred_fallthru
      _
  $region6: #{decode_layer_forward.1} parent=0 // loop_footer
    %s22 = sadd.s32 1, %s18
  $region7: #{decode_layer_forward.1} parent=0 // loop_footer_branch
    %17 = sbr.rel target = $region3
  $region8: #{decode_layer_forward.1} parent=0 // loop_exit
    _

</llo_original>
